<compile_context>
chip_gen: v6e
topology: v6e:2x2x1
jax: 0.10.0
libtpu: 0.0.40
codegen_flags: <defaults>
</compile_context>

<pallas_src>
import math
import functools

import jax
import jax.numpy as jnp
from jax.experimental import pallas as pl


def _layernorm(x, gamma, beta, eps=1e-5):
    mean = jnp.mean(x, axis=-1, keepdims=True)
    var = jnp.mean((x - mean) ** 2, axis=-1, keepdims=True)
    return (x - mean) * jax.lax.rsqrt(var + eps) * gamma + beta


def _store_lane_dense(o_ref, y):
    """Store a row-major (R, D) block into the lane-dense (R*D//L, L) output
    ref.  Bit-identical to o_ref[...] = y.reshape(-1, L), but built from static
    row slices + minor-dim concatenation only (safe Mosaic lowerings)."""
    R, D = y.shape
    L = o_ref.shape[-1]
    g = L // D                                   # source rows per output row
    for r in range(R // g):
        o_ref[r:r + 1, :] = jnp.concatenate(
            [y[g * r + j:g * r + j + 1, :] for j in range(g)], axis=1)


def encoder_layer_kernel(B, H,
                         x_ref, wmn_ref, w1_ref, w2_ref, vec_ref, b1_ref,
                         o_ref):
    x = x_ref[...]                               # (S*B, D), PyTorch (s, b) row order
    n = x.shape[0]

    vecs = vec_ref[...]                          # (H+6, D) packed vectors
    bo_eff = vecs[H:H + 1]                       # out-proj bias (+ folded V bias)
    b2 = vecs[H + 1:H + 2]
    g1, be1 = vecs[H + 2:H + 3], vecs[H + 3:H + 4]
    g2, be2 = vecs[H + 4:H + 5], vecs[H + 5:H + 6]

    # Same-batch additive mask: with (s, b) row order, row i belongs to batch
    # i % B.  Cross-batch entries get -1e30 -> exp() underflows to exactly 0,
    # so one full (n, n) score matmul replaces per-batch / per-head-slice
    # batched matmuls with zero relayouts.  Hoisted out of the head loop.
    rb = jax.lax.broadcasted_iota(jnp.int32, (n, n), 0) % B
    cb = jax.lax.broadcasted_iota(jnp.int32, (n, n), 1) % B
    mask_bias = jnp.where(rb == cb, 0.0, -1e30).astype(jnp.float32)

    # ---- multi-head self-attention via per-head composed (D, D) weights -----
    # (cast operands to bf16 here at production D on v6e/v7x, keep f32 accum)
    attn = jnp.zeros_like(x)
    for h in range(H):                           # H is small and static (unrolled)
        # t = x @ (Wq_h Wk_h^T / sqrt(Dh)) + c_h   -> full-D-lane matmul
        t = jnp.dot(x, wmn_ref[h], preferred_element_type=jnp.float32) + vecs[h:h + 1]
        s = jnp.einsum("qd,kd->qk", t, x,
                       preferred_element_type=jnp.float32) + mask_bias
        s = s - jnp.max(s, axis=-1, keepdims=True)
        p = jnp.exp(s)
        p = p * pl.reciprocal(jnp.sum(p, axis=-1, keepdims=True), approx=True)
        # ctx_h @ Wo_rows_h  ==  (p @ x) @ N_h,  N_h = Wv_h Wo_rows_h (no concat)
        u = jnp.dot(p, x, preferred_element_type=jnp.float32)
        attn = attn + jnp.dot(u, wmn_ref[H + h], preferred_element_type=jnp.float32)
    attn = attn + bo_eff

    # ---- residual + LayerNorm 1 ----------------------------------------------
    x1 = _layernorm(x + attn, g1, be1)

    # ---- feed-forward: Linear -> ReLU -> Linear --------------------------------
    h1 = jnp.dot(x1, w1_ref[...], preferred_element_type=jnp.float32) + b1_ref[...]
    h1 = jnp.maximum(h1, 0.0)
    ff = jnp.dot(h1, w2_ref[...], preferred_element_type=jnp.float32) + b2

    # ---- residual + LayerNorm 2, lane-dense store ------------------------------
    y = _layernorm(x1 + ff, g2, be2)             # (S*B, D), row-major (S, B, D)
    _store_lane_dense(o_ref, y)


def pack_params(p, num_heads):
    """Host-side, one-time repacking of the PyTorch-convention parameters into
    composed, kernel-friendly weights (see header comment for the algebra)."""
    D = p["g1"].shape[0]
    Dh = D // num_heads
    scale = 1.0 / math.sqrt(Dh)
    Wq = p["in_proj_w"][0:D]
    Wk = p["in_proj_w"][D:2 * D]
    Wv = p["in_proj_w"][2 * D:3 * D]
    bq = p["in_proj_b"][0:D]
    bv = p["in_proj_b"][2 * D:3 * D]
    Wo, bo = p["out_proj_w"], p["out_proj_b"]

    m_blocks, n_blocks, c_vecs = [], [], []
    for h in range(num_heads):
        hs = slice(h * Dh, (h + 1) * Dh)
        m_blocks.append(scale * (Wq[hs].T @ Wk[hs]))     # (D, D): scaled Wq_h Wk_h^T
        n_blocks.append(Wv[hs].T @ Wo[:, hs].T)          # (D, D): Wv_h @ Wo rows_h
        c_vecs.append(scale * (Wk[hs].T @ bq[hs]))       # (D,):   k-dependent score bias
    wmn = jnp.stack(m_blocks + n_blocks, axis=0)         # (2H, D, D)
    bo_eff = bo + bv @ Wo.T                              # out bias + folded V bias
    vecs = jnp.stack(c_vecs + [bo_eff, p["b2"], p["g1"], p["be1"],
                               p["g2"], p["be2"]], axis=0)   # (H+6, D)
    return {"wmn": wmn, "vecs": vecs,
            "w1": p["w1"].T, "b1": p["b1"].reshape(1, -1), "w2": p["w2"].T}


def encoder_layer_forward(x_sbd, kp, num_heads):
    """x_sbd: (S, B, D) float32, PyTorch nn.MultiheadAttention default layout."""
    S, B, D = x_sbd.shape
    n = S * B
    lanes = 128
    assert lanes % D == 0 and (n * D) % lanes == 0, "toy-shape packing assumption"

    kernel = functools.partial(encoder_layer_kernel, B, num_heads)

    # Single invocation: no grid, every operand is one full VMEM-resident block.
    out_slab = pl.pallas_call(
        kernel,
        out_shape=jax.ShapeDtypeStruct((n * D // lanes, lanes), jnp.float32),
    )(x_sbd.reshape(n, D),                 # free row-major reshape, no transpose
      kp["wmn"], kp["w1"], kp["w2"], kp["vecs"], kp["b1"])

    return out_slab.reshape(S, B, D)       # free row-major reshape, no transpose


def reference_forward(x_sbd, p, num_heads):
    """Pure-JAX reference mirroring PyTorch EncoderLayer (eval mode)."""
    S, B, D = x_sbd.shape
    H, Dh = num_heads, D // num_heads
    x = jnp.transpose(x_sbd, (1, 0, 2))                        # (B, S, D)
    qkv = x @ p["in_proj_w"].T + p["in_proj_b"]                # (B, S, 3D)
    q, k, v = jnp.split(qkv, 3, axis=-1)

    def heads(t):
        return t.reshape(B, S, H, Dh).transpose(0, 2, 1, 3)
    q, k, v = heads(q), heads(k), heads(v)
    s = jnp.einsum("bhqd,bhkd->bhqk", q, k) / math.sqrt(Dh)
    a = jax.nn.softmax(s, axis=-1)
    ctx = jnp.einsum("bhqk,bhkd->bhqd", a, v).transpose(0, 2, 1, 3).reshape(B, S, D)
    attn = ctx @ p["out_proj_w"].T + p["out_proj_b"]

    def ln(t, g, b):
        m = t.mean(-1, keepdims=True)
        var = ((t - m) ** 2).mean(-1, keepdims=True)
        return (t - m) / jnp.sqrt(var + 1e-5) * g + b

    x1 = ln(x + attn, p["g1"], p["be1"])
    ff = jnp.maximum(x1 @ p["w1"].T + p["b1"], 0.0) @ p["w2"].T + p["b2"]
    x2 = ln(x1 + ff, p["g2"], p["be2"])
    return jnp.transpose(x2, (1, 0, 2))


if __name__ == "__main__":
    # Small shapes consistent with the module: seq=8, batch=2, d_model=32,
    # num_heads=4, d_ff=64.
    S, B, D, H, d_ff = 8, 2, 32, 4, 64

    key = jax.random.PRNGKey(0)
    ks = jax.random.split(key, 10)

    # PyTorch-convention parameter shapes (Linear weight = (out, in)).
    params = {
        "in_proj_w": 0.05 * jax.random.normal(ks[0], (3 * D, D), jnp.float32),
        "in_proj_b": 0.05 * jax.random.normal(ks[1], (3 * D,), jnp.float32),
        "out_proj_w": 0.05 * jax.random.normal(ks[2], (D, D), jnp.float32),
        "out_proj_b": 0.05 * jax.random.normal(ks[3], (D,), jnp.float32),
        "w1": 0.05 * jax.random.normal(ks[4], (d_ff, D), jnp.float32),
        "b1": 0.05 * jax.random.normal(ks[5], (d_ff,), jnp.float32),
        "w2": 0.05 * jax.random.normal(ks[6], (D, d_ff), jnp.float32),
        "b2": 0.05 * jax.random.normal(ks[7], (D,), jnp.float32),
        "g1": jnp.ones((D,), jnp.float32), "be1": jnp.zeros((D,), jnp.float32),
        "g2": jnp.ones((D,), jnp.float32), "be2": jnp.zeros((D,), jnp.float32),
    }

    kp = pack_params(params, H)                     # one-time weight composition

    x = jax.random.normal(ks[8], (S, B, D), jnp.float32)   # PyTorch (S, B, D) layout

    out = encoder_layer_forward(x, kp, H)
    out = jax.block_until_ready(out)

    ref = reference_forward(x, params, H)
    assert out.shape == (S, B, D)
    assert jnp.allclose(out, ref, atol=1e-2, rtol=1e-2), float(jnp.max(jnp.abs(out - ref)))

    print("KERNEL_OK")
</pallas_src>

<mosaic_0001>
module attributes {stable_mosaic.version = 11 : i64} {
  func.func @encoder_layer_kernel(%arg0: memref<16x32xf32, #tpu.memory_space<vmem>>, %arg1: memref<8x32x32xf32, #tpu.memory_space<vmem>>, %arg2: memref<32x64xf32, #tpu.memory_space<vmem>>, %arg3: memref<64x32xf32, #tpu.memory_space<vmem>>, %arg4: memref<10x32xf32, #tpu.memory_space<vmem>>, %arg5: memref<1x64xf32, #tpu.memory_space<vmem>>, %arg6: memref<4x128xf32, #tpu.memory_space<vmem>>) attributes {dimension_semantics = [], scalar_prefetch = 0 : i64, scratch_operands = 0 : i64, tpu.core_type = #tpu.core_type<tc>} {
    %c0 = arith.constant 0 : index
    %c0_0 = arith.constant 0 : index
    %0 = vector.load %arg0[%c0, %c0_0] : memref<16x32xf32, #tpu.memory_space<vmem>>, vector<16x32xf32>
    %c0_1 = arith.constant 0 : index
    %c0_2 = arith.constant 0 : index
    %1 = vector.load %arg4[%c0_1, %c0_2] : memref<10x32xf32, #tpu.memory_space<vmem>>, vector<10x32xf32>
    %2 = vector.extract_strided_slice %1 {offsets = [4, 0], sizes = [1, 32], strides = [1, 1]} : vector<10x32xf32> to vector<1x32xf32>
    %3 = vector.extract_strided_slice %1 {offsets = [5, 0], sizes = [1, 32], strides = [1, 1]} : vector<10x32xf32> to vector<1x32xf32>
    %4 = vector.extract_strided_slice %1 {offsets = [6, 0], sizes = [1, 32], strides = [1, 1]} : vector<10x32xf32> to vector<1x32xf32>
    %5 = vector.extract_strided_slice %1 {offsets = [7, 0], sizes = [1, 32], strides = [1, 1]} : vector<10x32xf32> to vector<1x32xf32>
    %6 = vector.extract_strided_slice %1 {offsets = [8, 0], sizes = [1, 32], strides = [1, 1]} : vector<10x32xf32> to vector<1x32xf32>
    %7 = vector.extract_strided_slice %1 {offsets = [9, 0], sizes = [1, 32], strides = [1, 1]} : vector<10x32xf32> to vector<1x32xf32>
    %8 = tpu.iota {dimensions = array<i32: 0>} : vector<16x16xi32>
    %c2_i32 = arith.constant 2 : i32
    %c0_i32 = arith.constant 0 : i32
    %9 = arith.cmpi eq, %c2_i32, %c0_i32 : i32
    %c1_i32 = arith.constant 1 : i32
    %10 = arith.select %9, %c1_i32, %c2_i32 : i32
    %11 = vector.broadcast %10 : i32 to vector<16x16xi32>
    %12 = arith.remsi %8, %11 : vector<16x16xi32>
    %c0_i32_3 = arith.constant 0 : i32
    %13 = vector.broadcast %c0_i32_3 : i32 to vector<16x16xi32>
    %14 = arith.cmpi ne, %12, %13 : vector<16x16xi32>
    %c0_i32_4 = arith.constant 0 : i32
    %15 = vector.broadcast %c0_i32_4 : i32 to vector<16x16xi32>
    %16 = arith.cmpi slt, %12, %15 : vector<16x16xi32>
    %c0_i32_5 = arith.constant 0 : i32
    %17 = arith.cmpi slt, %10, %c0_i32_5 : i32
    %18 = vector.broadcast %17 : i1 to vector<16x16xi1>
    %19 = vector.broadcast %18 : vector<16x16xi1> to vector<16x16xi1>
    %20 = arith.xori %16, %19 : vector<16x16xi1>
    %21 = arith.andi %20, %14 : vector<16x16xi1>
    %22 = vector.broadcast %10 : i32 to vector<16x16xi32>
    %23 = arith.addi %12, %22 : vector<16x16xi32>
    %24 = arith.select %21, %23, %12 : vector<16x16xi1>, vector<16x16xi32>
    %25 = tpu.iota {dimensions = array<i32: 1>} : vector<16x16xi32>
    %c2_i32_6 = arith.constant 2 : i32
    %c0_i32_7 = arith.constant 0 : i32
    %26 = arith.cmpi eq, %c2_i32_6, %c0_i32_7 : i32
    %c1_i32_8 = arith.constant 1 : i32
    %27 = arith.select %26, %c1_i32_8, %c2_i32_6 : i32
    %28 = vector.broadcast %27 : i32 to vector<16x16xi32>
    %29 = arith.remsi %25, %28 : vector<16x16xi32>
    %c0_i32_9 = arith.constant 0 : i32
    %30 = vector.broadcast %c0_i32_9 : i32 to vector<16x16xi32>
    %31 = arith.cmpi ne, %29, %30 : vector<16x16xi32>
    %c0_i32_10 = arith.constant 0 : i32
    %32 = vector.broadcast %c0_i32_10 : i32 to vector<16x16xi32>
    %33 = arith.cmpi slt, %29, %32 : vector<16x16xi32>
    %c0_i32_11 = arith.constant 0 : i32
    %34 = arith.cmpi slt, %27, %c0_i32_11 : i32
    %35 = vector.broadcast %34 : i1 to vector<16x16xi1>
    %36 = vector.broadcast %35 : vector<16x16xi1> to vector<16x16xi1>
    %37 = arith.xori %33, %36 : vector<16x16xi1>
    %38 = arith.andi %37, %31 : vector<16x16xi1>
    %39 = vector.broadcast %27 : i32 to vector<16x16xi32>
    %40 = arith.addi %29, %39 : vector<16x16xi32>
    %41 = arith.select %38, %40, %29 : vector<16x16xi1>, vector<16x16xi32>
    %42 = arith.cmpi eq, %24, %41 : vector<16x16xi32>
    %cst = arith.constant 0.000000e+00 : f32
    %cst_12 = arith.constant -1.000000e+30 : f32
    %43 = vector.broadcast %cst : f32 to vector<16x16xf32>
    %44 = vector.broadcast %cst_12 : f32 to vector<16x16xf32>
    %45 = arith.select %42, %43, %44 : vector<16x16xi1>, vector<16x16xf32>
    %cst_13 = arith.constant 0.000000e+00 : f32
    %46 = vector.broadcast %cst_13 : f32 to vector<16x32xf32>
    %c0_14 = arith.constant 0 : index
    %c0_15 = arith.constant 0 : index
    %c0_16 = arith.constant 0 : index
    %47 = vector.load %arg1[%c0_14, %c0_15, %c0_16] : memref<8x32x32xf32, #tpu.memory_space<vmem>>, vector<1x32x32xf32>
    %48 = vector.shape_cast %47 : vector<1x32x32xf32> to vector<32x32xf32>
    %cst_17 = arith.constant dense<0.000000e+00> : vector<16x32xf32>
    %49 = tpu.matmul %0, %48, %cst_17 {dimension_numbers = #tpu.dot_dimension_numbers<[1], [0], [0], [1], [0, 0, 1, 1], [], []>} : vector<16x32xf32>, vector<32x32xf32>, vector<16x32xf32> -> vector<16x32xf32>
    %50 = vector.extract_strided_slice %1 {offsets = [0, 0], sizes = [1, 32], strides = [1, 1]} : vector<10x32xf32> to vector<1x32xf32>
    %51 = vector.broadcast %50 : vector<1x32xf32> to vector<16x32xf32>
    %52 = arith.addf %49, %51 : vector<16x32xf32>
    "tpu.trace_start"() <{level = 10 : i32, message = "qd,kd->qk"}> : () -> ()
    %cst_18 = arith.constant dense<0.000000e+00> : vector<16x16xf32>
    %53 = tpu.matmul %52, %0, %cst_18 {dimension_numbers = #tpu.dot_dimension_numbers<[1], [1], [0], [0], [0, 0, 1, 0], [], []>} : vector<16x32xf32>, vector<16x32xf32>, vector<16x16xf32> -> vector<16x16xf32>
    "tpu.trace_stop"() : () -> ()
    %54 = arith.addf %53, %45 : vector<16x16xf32>
    %cst_19 = arith.constant dense<0xFF800000> : vector<16xf32>
    %55 = vector.multi_reduction <maximumf>, %54, %cst_19 [1] : vector<16x16xf32> to vector<16xf32>
    %56 = vector.shape_cast %55 : vector<16xf32> to vector<16x1xf32>
    %57 = vector.broadcast %56 : vector<16x1xf32> to vector<16x16xf32>
    %58 = arith.subf %54, %57 : vector<16x16xf32>
    %59 = math.exp %58 : vector<16x16xf32>
    %cst_20 = arith.constant dense<0.000000e+00> : vector<16xf32>
    %60 = vector.multi_reduction <add>, %59, %cst_20 [1] : vector<16x16xf32> to vector<16xf32>
    %61 = vector.shape_cast %60 : vector<16xf32> to vector<16x1xf32>
    %62 = tpu.reciprocal %61 {approx = true} : vector<16x1xf32> -> vector<16x1xf32>
    %63 = vector.broadcast %62 : vector<16x1xf32> to vector<16x16xf32>
    %64 = arith.mulf %59, %63 : vector<16x16xf32>
    %cst_21 = arith.constant dense<0.000000e+00> : vector<16x32xf32>
    %65 = tpu.matmul %64, %0, %cst_21 {dimension_numbers = #tpu.dot_dimension_numbers<[1], [0], [0], [1], [0, 0, 1, 1], [], []>} : vector<16x16xf32>, vector<16x32xf32>, vector<16x32xf32> -> vector<16x32xf32>
    %c4 = arith.constant 4 : index
    %c0_22 = arith.constant 0 : index
    %c0_23 = arith.constant 0 : index
    %66 = vector.load %arg1[%c4, %c0_22, %c0_23] : memref<8x32x32xf32, #tpu.memory_space<vmem>>, vector<1x32x32xf32>
    %67 = vector.shape_cast %66 : vector<1x32x32xf32> to vector<32x32xf32>
    %cst_24 = arith.constant dense<0.000000e+00> : vector<16x32xf32>
    %68 = tpu.matmul %65, %67, %cst_24 {dimension_numbers = #tpu.dot_dimension_numbers<[1], [0], [0], [1], [0, 0, 1, 1], [], []>} : vector<16x32xf32>, vector<32x32xf32>, vector<16x32xf32> -> vector<16x32xf32>
    %69 = arith.addf %46, %68 : vector<16x32xf32>
    %c1 = arith.constant 1 : index
    %c0_25 = arith.constant 0 : index
    %c0_26 = arith.constant 0 : index
    %70 = vector.load %arg1[%c1, %c0_25, %c0_26] : memref<8x32x32xf32, #tpu.memory_space<vmem>>, vector<1x32x32xf32>
    %71 = vector.shape_cast %70 : vector<1x32x32xf32> to vector<32x32xf32>
    %cst_27 = arith.constant dense<0.000000e+00> : vector<16x32xf32>
    %72 = tpu.matmul %0, %71, %cst_27 {dimension_numbers = #tpu.dot_dimension_numbers<[1], [0], [0], [1], [0, 0, 1, 1], [], []>} : vector<16x32xf32>, vector<32x32xf32>, vector<16x32xf32> -> vector<16x32xf32>
    %73 = vector.extract_strided_slice %1 {offsets = [1, 0], sizes = [1, 32], strides = [1, 1]} : vector<10x32xf32> to vector<1x32xf32>
    %74 = vector.broadcast %73 : vector<1x32xf32> to vector<16x32xf32>
    %75 = arith.addf %72, %74 : vector<16x32xf32>
    "tpu.trace_start"() <{level = 10 : i32, message = "qd,kd->qk"}> : () -> ()
    %cst_28 = arith.constant dense<0.000000e+00> : vector<16x16xf32>
    %76 = tpu.matmul %75, %0, %cst_28 {dimension_numbers = #tpu.dot_dimension_numbers<[1], [1], [0], [0], [0, 0, 1, 0], [], []>} : vector<16x32xf32>, vector<16x32xf32>, vector<16x16xf32> -> vector<16x16xf32>
    "tpu.trace_stop"() : () -> ()
    %77 = arith.addf %76, %45 : vector<16x16xf32>
    %cst_29 = arith.constant dense<0xFF800000> : vector<16xf32>
    %78 = vector.multi_reduction <maximumf>, %77, %cst_29 [1] : vector<16x16xf32> to vector<16xf32>
    %79 = vector.shape_cast %78 : vector<16xf32> to vector<16x1xf32>
    %80 = vector.broadcast %79 : vector<16x1xf32> to vector<16x16xf32>
    %81 = arith.subf %77, %80 : vector<16x16xf32>
    %82 = math.exp %81 : vector<16x16xf32>
    %cst_30 = arith.constant dense<0.000000e+00> : vector<16xf32>
    %83 = vector.multi_reduction <add>, %82, %cst_30 [1] : vector<16x16xf32> to vector<16xf32>
    %84 = vector.shape_cast %83 : vector<16xf32> to vector<16x1xf32>
    %85 = tpu.reciprocal %84 {approx = true} : vector<16x1xf32> -> vector<16x1xf32>
    %86 = vector.broadcast %85 : vector<16x1xf32> to vector<16x16xf32>
    %87 = arith.mulf %82, %86 : vector<16x16xf32>
    %cst_31 = arith.constant dense<0.000000e+00> : vector<16x32xf32>
    %88 = tpu.matmul %87, %0, %cst_31 {dimension_numbers = #tpu.dot_dimension_numbers<[1], [0], [0], [1], [0, 0, 1, 1], [], []>} : vector<16x16xf32>, vector<16x32xf32>, vector<16x32xf32> -> vector<16x32xf32>
    %c5 = arith.constant 5 : index
    %c0_32 = arith.constant 0 : index
    %c0_33 = arith.constant 0 : index
    %89 = vector.load %arg1[%c5, %c0_32, %c0_33] : memref<8x32x32xf32, #tpu.memory_space<vmem>>, vector<1x32x32xf32>
    %90 = vector.shape_cast %89 : vector<1x32x32xf32> to vector<32x32xf32>
    %cst_34 = arith.constant dense<0.000000e+00> : vector<16x32xf32>
    %91 = tpu.matmul %88, %90, %cst_34 {dimension_numbers = #tpu.dot_dimension_numbers<[1], [0], [0], [1], [0, 0, 1, 1], [], []>} : vector<16x32xf32>, vector<32x32xf32>, vector<16x32xf32> -> vector<16x32xf32>
    %92 = arith.addf %69, %91 : vector<16x32xf32>
    %c2 = arith.constant 2 : index
    %c0_35 = arith.constant 0 : index
    %c0_36 = arith.constant 0 : index
    %93 = vector.load %arg1[%c2, %c0_35, %c0_36] : memref<8x32x32xf32, #tpu.memory_space<vmem>>, vector<1x32x32xf32>
    %94 = vector.shape_cast %93 : vector<1x32x32xf32> to vector<32x32xf32>
    %cst_37 = arith.constant dense<0.000000e+00> : vector<16x32xf32>
    %95 = tpu.matmul %0, %94, %cst_37 {dimension_numbers = #tpu.dot_dimension_numbers<[1], [0], [0], [1], [0, 0, 1, 1], [], []>} : vector<16x32xf32>, vector<32x32xf32>, vector<16x32xf32> -> vector<16x32xf32>
    %96 = vector.extract_strided_slice %1 {offsets = [2, 0], sizes = [1, 32], strides = [1, 1]} : vector<10x32xf32> to vector<1x32xf32>
    %97 = vector.broadcast %96 : vector<1x32xf32> to vector<16x32xf32>
    %98 = arith.addf %95, %97 : vector<16x32xf32>
    "tpu.trace_start"() <{level = 10 : i32, message = "qd,kd->qk"}> : () -> ()
    %cst_38 = arith.constant dense<0.000000e+00> : vector<16x16xf32>
    %99 = tpu.matmul %98, %0, %cst_38 {dimension_numbers = #tpu.dot_dimension_numbers<[1], [1], [0], [0], [0, 0, 1, 0], [], []>} : vector<16x32xf32>, vector<16x32xf32>, vector<16x16xf32> -> vector<16x16xf32>
    "tpu.trace_stop"() : () -> ()
    %100 = arith.addf %99, %45 : vector<16x16xf32>
    %cst_39 = arith.constant dense<0xFF800000> : vector<16xf32>
    %101 = vector.multi_reduction <maximumf>, %100, %cst_39 [1] : vector<16x16xf32> to vector<16xf32>
    %102 = vector.shape_cast %101 : vector<16xf32> to vector<16x1xf32>
    %103 = vector.broadcast %102 : vector<16x1xf32> to vector<16x16xf32>
    %104 = arith.subf %100, %103 : vector<16x16xf32>
    %105 = math.exp %104 : vector<16x16xf32>
    %cst_40 = arith.constant dense<0.000000e+00> : vector<16xf32>
    %106 = vector.multi_reduction <add>, %105, %cst_40 [1] : vector<16x16xf32> to vector<16xf32>
    %107 = vector.shape_cast %106 : vector<16xf32> to vector<16x1xf32>
    %108 = tpu.reciprocal %107 {approx = true} : vector<16x1xf32> -> vector<16x1xf32>
    %109 = vector.broadcast %108 : vector<16x1xf32> to vector<16x16xf32>
    %110 = arith.mulf %105, %109 : vector<16x16xf32>
    %cst_41 = arith.constant dense<0.000000e+00> : vector<16x32xf32>
    %111 = tpu.matmul %110, %0, %cst_41 {dimension_numbers = #tpu.dot_dimension_numbers<[1], [0], [0], [1], [0, 0, 1, 1], [], []>} : vector<16x16xf32>, vector<16x32xf32>, vector<16x32xf32> -> vector<16x32xf32>
    %c6 = arith.constant 6 : index
    %c0_42 = arith.constant 0 : index
    %c0_43 = arith.constant 0 : index
    %112 = vector.load %arg1[%c6, %c0_42, %c0_43] : memref<8x32x32xf32, #tpu.memory_space<vmem>>, vector<1x32x32xf32>
    %113 = vector.shape_cast %112 : vector<1x32x32xf32> to vector<32x32xf32>
    %cst_44 = arith.constant dense<0.000000e+00> : vector<16x32xf32>
    %114 = tpu.matmul %111, %113, %cst_44 {dimension_numbers = #tpu.dot_dimension_numbers<[1], [0], [0], [1], [0, 0, 1, 1], [], []>} : vector<16x32xf32>, vector<32x32xf32>, vector<16x32xf32> -> vector<16x32xf32>
    %115 = arith.addf %92, %114 : vector<16x32xf32>
    %c3 = arith.constant 3 : index
    %c0_45 = arith.constant 0 : index
    %c0_46 = arith.constant 0 : index
    %116 = vector.load %arg1[%c3, %c0_45, %c0_46] : memref<8x32x32xf32, #tpu.memory_space<vmem>>, vector<1x32x32xf32>
    %117 = vector.shape_cast %116 : vector<1x32x32xf32> to vector<32x32xf32>
    %cst_47 = arith.constant dense<0.000000e+00> : vector<16x32xf32>
    %118 = tpu.matmul %0, %117, %cst_47 {dimension_numbers = #tpu.dot_dimension_numbers<[1], [0], [0], [1], [0, 0, 1, 1], [], []>} : vector<16x32xf32>, vector<32x32xf32>, vector<16x32xf32> -> vector<16x32xf32>
    %119 = vector.extract_strided_slice %1 {offsets = [3, 0], sizes = [1, 32], strides = [1, 1]} : vector<10x32xf32> to vector<1x32xf32>
    %120 = vector.broadcast %119 : vector<1x32xf32> to vector<16x32xf32>
    %121 = arith.addf %118, %120 : vector<16x32xf32>
    "tpu.trace_start"() <{level = 10 : i32, message = "qd,kd->qk"}> : () -> ()
    %cst_48 = arith.constant dense<0.000000e+00> : vector<16x16xf32>
    %122 = tpu.matmul %121, %0, %cst_48 {dimension_numbers = #tpu.dot_dimension_numbers<[1], [1], [0], [0], [0, 0, 1, 0], [], []>} : vector<16x32xf32>, vector<16x32xf32>, vector<16x16xf32> -> vector<16x16xf32>
    "tpu.trace_stop"() : () -> ()
    %123 = arith.addf %122, %45 : vector<16x16xf32>
    %cst_49 = arith.constant dense<0xFF800000> : vector<16xf32>
    %124 = vector.multi_reduction <maximumf>, %123, %cst_49 [1] : vector<16x16xf32> to vector<16xf32>
    %125 = vector.shape_cast %124 : vector<16xf32> to vector<16x1xf32>
    %126 = vector.broadcast %125 : vector<16x1xf32> to vector<16x16xf32>
    %127 = arith.subf %123, %126 : vector<16x16xf32>
    %128 = math.exp %127 : vector<16x16xf32>
    %cst_50 = arith.constant dense<0.000000e+00> : vector<16xf32>
    %129 = vector.multi_reduction <add>, %128, %cst_50 [1] : vector<16x16xf32> to vector<16xf32>
    %130 = vector.shape_cast %129 : vector<16xf32> to vector<16x1xf32>
    %131 = tpu.reciprocal %130 {approx = true} : vector<16x1xf32> -> vector<16x1xf32>
    %132 = vector.broadcast %131 : vector<16x1xf32> to vector<16x16xf32>
    %133 = arith.mulf %128, %132 : vector<16x16xf32>
    %cst_51 = arith.constant dense<0.000000e+00> : vector<16x32xf32>
    %134 = tpu.matmul %133, %0, %cst_51 {dimension_numbers = #tpu.dot_dimension_numbers<[1], [0], [0], [1], [0, 0, 1, 1], [], []>} : vector<16x16xf32>, vector<16x32xf32>, vector<16x32xf32> -> vector<16x32xf32>
    %c7 = arith.constant 7 : index
    %c0_52 = arith.constant 0 : index
    %c0_53 = arith.constant 0 : index
    %135 = vector.load %arg1[%c7, %c0_52, %c0_53] : memref<8x32x32xf32, #tpu.memory_space<vmem>>, vector<1x32x32xf32>
    %136 = vector.shape_cast %135 : vector<1x32x32xf32> to vector<32x32xf32>
    %cst_54 = arith.constant dense<0.000000e+00> : vector<16x32xf32>
    %137 = tpu.matmul %134, %136, %cst_54 {dimension_numbers = #tpu.dot_dimension_numbers<[1], [0], [0], [1], [0, 0, 1, 1], [], []>} : vector<16x32xf32>, vector<32x32xf32>, vector<16x32xf32> -> vector<16x32xf32>
    %138 = arith.addf %115, %137 : vector<16x32xf32>
    %139 = vector.broadcast %2 : vector<1x32xf32> to vector<16x32xf32>
    %140 = arith.addf %138, %139 : vector<16x32xf32>
    %141 = arith.addf %0, %140 : vector<16x32xf32>
    %cst_55 = arith.constant dense<0.000000e+00> : vector<16xf32>
    %142 = vector.multi_reduction <add>, %141, %cst_55 [1] : vector<16x32xf32> to vector<16xf32>
    %143 = vector.shape_cast %142 : vector<16xf32> to vector<16x1xf32>
    %cst_56 = arith.constant 3.200000e+01 : f32
    %144 = vector.broadcast %cst_56 : f32 to vector<16x1xf32>
    %145 = arith.divf %143, %144 : vector<16x1xf32>
    %146 = vector.broadcast %145 : vector<16x1xf32> to vector<16x32xf32>
    %147 = arith.subf %141, %146 : vector<16x32xf32>
    %148 = arith.mulf %147, %147 : vector<16x32xf32>
    %cst_57 = arith.constant dense<0.000000e+00> : vector<16xf32>
    %149 = vector.multi_reduction <add>, %148, %cst_57 [1] : vector<16x32xf32> to vector<16xf32>
    %150 = vector.shape_cast %149 : vector<16xf32> to vector<16x1xf32>
    %cst_58 = arith.constant 3.200000e+01 : f32
    %151 = vector.broadcast %cst_58 : f32 to vector<16x1xf32>
    %152 = arith.divf %150, %151 : vector<16x1xf32>
    %153 = vector.broadcast %145 : vector<16x1xf32> to vector<16x32xf32>
    %154 = arith.subf %141, %153 : vector<16x32xf32>
    %cst_59 = arith.constant 9.99999974E-6 : f32
    %155 = vector.broadcast %cst_59 : f32 to vector<16x1xf32>
    %156 = arith.addf %152, %155 : vector<16x1xf32>
    %157 = math.rsqrt %156 : vector<16x1xf32>
    %158 = vector.broadcast %157 : vector<16x1xf32> to vector<16x32xf32>
    %159 = arith.mulf %154, %158 : vector<16x32xf32>
    %160 = vector.broadcast %4 : vector<1x32xf32> to vector<16x32xf32>
    %161 = arith.mulf %159, %160 : vector<16x32xf32>
    %162 = vector.broadcast %5 : vector<1x32xf32> to vector<16x32xf32>
    %163 = arith.addf %161, %162 : vector<16x32xf32>
    %c0_60 = arith.constant 0 : index
    %c0_61 = arith.constant 0 : index
    %164 = vector.load %arg2[%c0_60, %c0_61] : memref<32x64xf32, #tpu.memory_space<vmem>>, vector<32x64xf32>
    %cst_62 = arith.constant dense<0.000000e+00> : vector<16x64xf32>
    %165 = tpu.matmul %163, %164, %cst_62 {dimension_numbers = #tpu.dot_dimension_numbers<[1], [0], [0], [1], [0, 0, 1, 1], [], []>} : vector<16x32xf32>, vector<32x64xf32>, vector<16x64xf32> -> vector<16x64xf32>
    %c0_63 = arith.constant 0 : index
    %c0_64 = arith.constant 0 : index
    %166 = vector.load %arg5[%c0_63, %c0_64] : memref<1x64xf32, #tpu.memory_space<vmem>>, vector<1x64xf32>
    %167 = vector.broadcast %166 : vector<1x64xf32> to vector<16x64xf32>
    %168 = arith.addf %165, %167 : vector<16x64xf32>
    %cst_65 = arith.constant 0.000000e+00 : f32
    %169 = vector.broadcast %cst_65 : f32 to vector<16x64xf32>
    %170 = arith.maximumf %168, %169 : vector<16x64xf32>
    %c0_66 = arith.constant 0 : index
    %c0_67 = arith.constant 0 : index
    %171 = vector.load %arg3[%c0_66, %c0_67] : memref<64x32xf32, #tpu.memory_space<vmem>>, vector<64x32xf32>
    %cst_68 = arith.constant dense<0.000000e+00> : vector<16x32xf32>
    %172 = tpu.matmul %170, %171, %cst_68 {dimension_numbers = #tpu.dot_dimension_numbers<[1], [0], [0], [1], [0, 0, 1, 1], [], []>} : vector<16x64xf32>, vector<64x32xf32>, vector<16x32xf32> -> vector<16x32xf32>
    %173 = vector.broadcast %3 : vector<1x32xf32> to vector<16x32xf32>
    %174 = arith.addf %172, %173 : vector<16x32xf32>
    %175 = arith.addf %163, %174 : vector<16x32xf32>
    %cst_69 = arith.constant dense<0.000000e+00> : vector<16xf32>
    %176 = vector.multi_reduction <add>, %175, %cst_69 [1] : vector<16x32xf32> to vector<16xf32>
    %177 = vector.shape_cast %176 : vector<16xf32> to vector<16x1xf32>
    %cst_70 = arith.constant 3.200000e+01 : f32
    %178 = vector.broadcast %cst_70 : f32 to vector<16x1xf32>
    %179 = arith.divf %177, %178 : vector<16x1xf32>
    %180 = vector.broadcast %179 : vector<16x1xf32> to vector<16x32xf32>
    %181 = arith.subf %175, %180 : vector<16x32xf32>
    %182 = arith.mulf %181, %181 : vector<16x32xf32>
    %cst_71 = arith.constant dense<0.000000e+00> : vector<16xf32>
    %183 = vector.multi_reduction <add>, %182, %cst_71 [1] : vector<16x32xf32> to vector<16xf32>
    %184 = vector.shape_cast %183 : vector<16xf32> to vector<16x1xf32>
    %cst_72 = arith.constant 3.200000e+01 : f32
    %185 = vector.broadcast %cst_72 : f32 to vector<16x1xf32>
    %186 = arith.divf %184, %185 : vector<16x1xf32>
    %187 = vector.broadcast %179 : vector<16x1xf32> to vector<16x32xf32>
    %188 = arith.subf %175, %187 : vector<16x32xf32>
    %cst_73 = arith.constant 9.99999974E-6 : f32
    %189 = vector.broadcast %cst_73 : f32 to vector<16x1xf32>
    %190 = arith.addf %186, %189 : vector<16x1xf32>
    %191 = math.rsqrt %190 : vector<16x1xf32>
    %192 = vector.broadcast %191 : vector<16x1xf32> to vector<16x32xf32>
    %193 = arith.mulf %188, %192 : vector<16x32xf32>
    %194 = vector.broadcast %6 : vector<1x32xf32> to vector<16x32xf32>
    %195 = arith.mulf %193, %194 : vector<16x32xf32>
    %196 = vector.broadcast %7 : vector<1x32xf32> to vector<16x32xf32>
    %197 = arith.addf %195, %196 : vector<16x32xf32>
    %198 = vector.extract_strided_slice %197 {offsets = [0, 0], sizes = [1, 32], strides = [1, 1]} : vector<16x32xf32> to vector<1x32xf32>
    %199 = vector.extract_strided_slice %197 {offsets = [1, 0], sizes = [1, 32], strides = [1, 1]} : vector<16x32xf32> to vector<1x32xf32>
    %200 = vector.extract_strided_slice %197 {offsets = [2, 0], sizes = [1, 32], strides = [1, 1]} : vector<16x32xf32> to vector<1x32xf32>
    %201 = vector.extract_strided_slice %197 {offsets = [3, 0], sizes = [1, 32], strides = [1, 1]} : vector<16x32xf32> to vector<1x32xf32>
    %202 = tpu.concatenate %198, %199, %200, %201 in 1 : vector<1x32xf32>, vector<1x32xf32>, vector<1x32xf32>, vector<1x32xf32> -> vector<1x128xf32>
    %c0_74 = arith.constant 0 : index
    %c0_75 = arith.constant 0 : index
    %203 = vector.load %arg6[%c0_74, %c0_75] : memref<4x128xf32, #tpu.memory_space<vmem>>, vector<1x128xf32>
    tpu.vector_store %arg6[%c0_74, %c0_75], %202 {strides = array<i32>} : memref<4x128xf32, #tpu.memory_space<vmem>>, vector<1x128xf32>,
    %204 = vector.extract_strided_slice %197 {offsets = [4, 0], sizes = [1, 32], strides = [1, 1]} : vector<16x32xf32> to vector<1x32xf32>
    %205 = vector.extract_strided_slice %197 {offsets = [5, 0], sizes = [1, 32], strides = [1, 1]} : vector<16x32xf32> to vector<1x32xf32>
    %206 = vector.extract_strided_slice %197 {offsets = [6, 0], sizes = [1, 32], strides = [1, 1]} : vector<16x32xf32> to vector<1x32xf32>
    %207 = vector.extract_strided_slice %197 {offsets = [7, 0], sizes = [1, 32], strides = [1, 1]} : vector<16x32xf32> to vector<1x32xf32>
    %208 = tpu.concatenate %204, %205, %206, %207 in 1 : vector<1x32xf32>, vector<1x32xf32>, vector<1x32xf32>, vector<1x32xf32> -> vector<1x128xf32>
    %c1_76 = arith.constant 1 : index
    %c0_77 = arith.constant 0 : index
    %209 = vector.load %arg6[%c1_76, %c0_77] : memref<4x128xf32, #tpu.memory_space<vmem>>, vector<1x128xf32>
    tpu.vector_store %arg6[%c1_76, %c0_77], %208 {strides = array<i32>} : memref<4x128xf32, #tpu.memory_space<vmem>>, vector<1x128xf32>,
    %210 = vector.extract_strided_slice %197 {offsets = [8, 0], sizes = [1, 32], strides = [1, 1]} : vector<16x32xf32> to vector<1x32xf32>
    %211 = vector.extract_strided_slice %197 {offsets = [9, 0], sizes = [1, 32], strides = [1, 1]} : vector<16x32xf32> to vector<1x32xf32>
    %212 = vector.extract_strided_slice %197 {offsets = [10, 0], sizes = [1, 32], strides = [1, 1]} : vector<16x32xf32> to vector<1x32xf32>
    %213 = vector.extract_strided_slice %197 {offsets = [11, 0], sizes = [1, 32], strides = [1, 1]} : vector<16x32xf32> to vector<1x32xf32>
    %214 = tpu.concatenate %210, %211, %212, %213 in 1 : vector<1x32xf32>, vector<1x32xf32>, vector<1x32xf32>, vector<1x32xf32> -> vector<1x128xf32>
    %c2_78 = arith.constant 2 : index
    %c0_79 = arith.constant 0 : index
    %215 = vector.load %arg6[%c2_78, %c0_79] : memref<4x128xf32, #tpu.memory_space<vmem>>, vector<1x128xf32>
    tpu.vector_store %arg6[%c2_78, %c0_79], %214 {strides = array<i32>} : memref<4x128xf32, #tpu.memory_space<vmem>>, vector<1x128xf32>,
    %216 = vector.extract_strided_slice %197 {offsets = [12, 0], sizes = [1, 32], strides = [1, 1]} : vector<16x32xf32> to vector<1x32xf32>
    %217 = vector.extract_strided_slice %197 {offsets = [13, 0], sizes = [1, 32], strides = [1, 1]} : vector<16x32xf32> to vector<1x32xf32>
    %218 = vector.extract_strided_slice %197 {offsets = [14, 0], sizes = [1, 32], strides = [1, 1]} : vector<16x32xf32> to vector<1x32xf32>
    %219 = vector.extract_strided_slice %197 {offsets = [15, 0], sizes = [1, 32], strides = [1, 1]} : vector<16x32xf32> to vector<1x32xf32>
    %220 = tpu.concatenate %216, %217, %218, %219 in 1 : vector<1x32xf32>, vector<1x32xf32>, vector<1x32xf32>, vector<1x32xf32> -> vector<1x128xf32>
    %c3_80 = arith.constant 3 : index
    %c0_81 = arith.constant 0 : index
    %221 = vector.load %arg6[%c3_80, %c0_81] : memref<4x128xf32, #tpu.memory_space<vmem>>, vector<1x128xf32>
    tpu.vector_store %arg6[%c3_80, %c0_81], %220 {strides = array<i32>} : memref<4x128xf32, #tpu.memory_space<vmem>>, vector<1x128xf32>,
    return
  }
}

</mosaic_0001>

<llo_original>
// kernel: tpu_custom_call.1
$region0: #{tpu_custom_call.1}
  #allocation0 [shape = 'u32[]', space=smem, size = 0x4, offset = 0x4, fixed_abs, tag = 'smem constant byte address 0x4 - core index']
  #allocation1 [shape = 'u32[144,128]{1,0:T(1,128)}', space=vmem, size = 0x12000, scoped, tag = 'internal scratch']
  %s0 = inlined_call_operand.vmem [shape: f32[16,32], index: 0, kind: input, shape index: {}]
  %s1 = inlined_call_operand.hbm [shape: f32[8,32,32], index: 1, kind: input, shape index: {}]
  %s2 = inlined_call_operand.vmem [shape: f32[32,64], index: 2, kind: input, shape index: {}]
  %s3 = inlined_call_operand.vmem [shape: f32[64,32], index: 3, kind: input, shape index: {}]
  %s4 = inlined_call_operand.vmem [shape: f32[10,32], index: 4, kind: input, shape index: {}]
  %s5 = inlined_call_operand.vmem [shape: f32[1,64], index: 5, kind: input, shape index: {}]
  %s6 = inlined_call_operand.hbm [shape: f32[4,128], index: 6, kind: output, shape index: {}]
  %s7 = sld [smem:[#allocation0]]
  $region38: #{tpu_custom_call.1} parent=0
    _
  %s9 = ssub.s32 1, %s7
  %s10 = scalar_select 0, %s9, %s7
  $region1: #{tpu_custom_call.1} parent=0
    #allocation2 [shape = 'u8[131072]{0}', space=vmem, size = 0x20000, scoped, tag = 'input window, operand 1, single buffered']
    #allocation3 [shape = 's32[1]{0}', space=sflag, size = 0x4, scoped, tag = 'scoped memory for tpu_custom_call.1']
    #allocation4 [shape = 's32[1]{0}', space=sflag, size = 0x4, scoped, tag = 'scoped memory for tpu_custom_call.1']
    #allocation5 [shape = 'u8[2048]{0}', space=vmem, size = 0x800, scoped, tag = 'output window, operand 0, single buffered']
    %11 = vsyncpa [#allocation3], 0
    %12 = vsyncpa [#allocation4], 0
    // Predicated region
    $region2: #{tpu_custom_call.1} parent=1 // pred_check
      _
    $region3: #{tpu_custom_call.1} parent=1 // pred_check_branch
      %14 = sbr.rel (0) target = $region5
    $region4: #{tpu_custom_call.1} parent=1 // pred_region
      _
    $region5: #{tpu_custom_call.1} parent=1 // pred_fallthru
      _
    // Predicated region
    $region6: #{tpu_custom_call.1} parent=1 // pred_check
      _
    $region7: #{tpu_custom_call.1} parent=1 // pred_check_branch
      %16 = sbr.rel (0) target = $region9
    $region8: #{tpu_custom_call.1} parent=1 // pred_region
      %s18 = ssub.s32 4096, 4096
      %19 = vsyncadd [#allocation3], %s18
      %s20 = sshll.u32 [#allocation2], 4
      %s21 = int_to_ptr.vmem [resolvable:$true] %s20
      %26 = dma.hbm_to_vmem [thread:$0]  %s1, 4096, %s21, [#allocation3], 128, 128, 8
    $region9: #{tpu_custom_call.1} parent=1 // pred_fallthru
      _
    // Predicated region
    $region10: #{tpu_custom_call.1} parent=1 // pred_check
      _
    $region11: #{tpu_custom_call.1} parent=1 // pred_check_branch
      %28 = sbr.rel (0) target = $region13
    $region12: #{tpu_custom_call.1} parent=1 // pred_region
      _
    $region13: #{tpu_custom_call.1} parent=1 // pred_fallthru
      _
    // Predicated region
    $region14: #{tpu_custom_call.1} parent=1 // pred_check
      _
    $region15: #{tpu_custom_call.1} parent=1 // pred_check_branch
      %30 = sbr.rel (0) target = $region17
    $region16: #{tpu_custom_call.1} parent=1 // pred_region
      _
    $region17: #{tpu_custom_call.1} parent=1 // pred_fallthru
      _
    // Predicated region
    $region18: #{tpu_custom_call.1} parent=1 // pred_check
      _
    $region19: #{tpu_custom_call.1} parent=1 // pred_check_branch
      %32 = sbr.rel (0) target = $region21
    $region20: #{tpu_custom_call.1} parent=1 // pred_region
      _
    $region21: #{tpu_custom_call.1} parent=1 // pred_fallthru
      _
    // Predicated region
    $region22: #{tpu_custom_call.1} parent=1 // pred_check
      _
    $region23: #{tpu_custom_call.1} parent=1 // pred_check_branch
      %34 = sbr.rel (0) target = $region25
    $region24: #{tpu_custom_call.1} parent=1 // pred_region
      _
    $region25: #{tpu_custom_call.1} parent=1 // pred_fallthru
      _
    // Predicated region
    $region26: #{tpu_custom_call.1} parent=1 // pred_check
      _
    $region27: #{tpu_custom_call.1} parent=1 // pred_check_branch
      %36 = sbr.rel (0) target = $region29
    $region28: #{tpu_custom_call.1} parent=1 // pred_region
      %37 = dma.done [#allocation3], 4096
    $region29: #{tpu_custom_call.1} parent=1 // pred_fallthru
      _
    %v38 = vld [vmem:[%s0] sm:$0xff]
    %v39 = vld [vmem:[%s0 + $0x8] sm:$0xff]
    %v40 = vld [vmem:[%s4] sm:$0xff]
    %v41 = vld [vmem:[%s4 + $0x8] sm:$0x3]
    %v42 = vlaneseq
    %v43 = vshrl.u32 %v42, 7
    %v44 = vadd.s32 %v43, 8
    %vm45 = vcmp.lt.s32.totalorder %v43, 0
    %v46 = vsub.s32 0, %v43
    %v47 = vsel %vm45, %v46, %v43
    %v48 = vshrl.u32 %v47, 1
    %v49 = vand.u32 %v47, 1
    %v50 = vsub.s32 0, %v49
    %v51 = vsel %vm45, %v50, %v49
    %vm52 = vcmp.lt.s32.totalorder %v44, 0
    %v53 = vsub.s32 0, %v44
    %v54 = vsel %vm52, %v53, %v44
    %v55 = vshrl.u32 %v54, 1
    %v56 = vand.u32 %v54, 1
    %v57 = vsub.s32 0, %v56
    %v58 = vsel %vm52, %v57, %v56
    %vm59 = vcmp.ne.s32.totalorder %v51, 0
    %vm60 = vcmp.ne.s32.totalorder %v58, 0
    %vm61 = vcmp.lt.s32.totalorder %v51, 0
    %vm62 = vcmp.lt.s32.totalorder %v58, 0
    %vm63 = vmand %vm61, %vm59
    %vm64 = vmand %vm62, %vm60
    %v65 = vadd.s32 %v51, 2
    %v66 = vadd.s32 %v58, 2
    %v67 = vsel %vm63, %v65, %v51
    %v68 = vsel %vm64, %v66, %v58
    %v69 = vlaneseq
    %v70 = vand.u32 %v69, 127
    %vm71 = vcmp.lt.s32.totalorder %v70, 0
    %v72 = vsub.s32 0, %v70
    %v73 = vsel %vm71, %v72, %v70
    %v74 = vshrl.u32 %v73, 1
    %v75 = vand.u32 %v73, 1
    %v76 = vsub.s32 0, %v75
    %v77 = vsel %vm71, %v76, %v75
    %vm78 = vcmp.ne.s32.totalorder %v77, 0
    %vm79 = vcmp.lt.s32.totalorder %v77, 0
    %vm80 = vmand %vm79, %vm78
    %v81 = vadd.s32 %v77, 2
    %v82 = vsel %vm80, %v81, %v77
    %vm83 = vcmp.eq.s32.totalorder %v67, %v82
    %vm84 = vcmp.eq.s32.totalorder %v68, %v82
    %v85 = vsel %vm83, 0.0, -1e+30
    %v86 = vsel %vm84, 0.0, -1e+30
    %v87 = vld [vmem:[#allocation2] sm:$0xff]
    %v88 = vld [vmem:[#allocation2 + $0x8] sm:$0xff]
    %v89 = vld [vmem:[#allocation2 + $0x10] sm:$0xff]
    %v90 = vld [vmem:[#allocation2 + $0x18] sm:$0xff]
    %v91 = vlaneseq
    %v92 = vshrl.u32 %v91, 7
    %v93 = vsub.s32 0, %v92
    %v94 = vrot.slane %v40, %v93
    %vm95 = vcmask 261120
    %v97 = vsel %vm95, %v38, 0
    %v100 = vsel %vm95, %v39, 0
    %102 = vmatprep.subr.mxu0 0.0
    %103 = vmatpush1.msra.mxu0 0.0
    %104 = vmatprep.subr.mxu0 0.0
    %105 = vmatpush1.msra.mxu0 0.0
    %106 = vmatprep.subr.mxu0 0.0
    %107 = vmatpush1.msra.mxu0 0.0
    %108 = vmatprep.subr.mxu0 0.0
    %109 = vmatpush1.msra.mxu0 0.0
    %110 = vmatprep.subr.mxu0 0.0
    %111 = vmatpush1.msra.mxu0 0.0
    %112 = vmatprep.subr.mxu0 0.0
    %113 = vmatpush1.msra.mxu0 0.0
    %114 = vmatprep.subr.mxu0 0.0
    %115 = vmatpush1.msra.mxu0 0.0
    %116 = vmatprep.subr.mxu0 0.0
    %117 = vmatpush1.msra.mxu0 0.0
    %118 = vmatprep.subr.mxu0 0.0
    %119 = vmatpush1.msra.mxu0 0.0
    %120 = vmatprep.subr.mxu0 0.0
    %121 = vmatpush1.msra.mxu0 0.0
    %122 = vmatprep.subr.mxu0 0.0
    %123 = vmatpush1.msra.mxu0 0.0
    %124 = vmatprep.subr.mxu0 0.0
    %125 = vmatpush1.msra.mxu0 0.0
    %126 = vmatprep.subr.mxu0 0.0
    %127 = vmatpush1.msra.mxu0 %v90
    %128 = vmatprep.subr.mxu0 0.0
    %129 = vmatpush1.msra.mxu0 %v89
    %130 = vmatprep.subr.mxu0 0.0
    %131 = vmatpush1.msra.mxu0 %v88
    %132 = vmatprep.subr.mxu0 0.0
    %133 = vmatpush1.msra.mxu0 %v87
    %134 = vmatprep.subr.mxu0 0.0
    %135 = vmatpush2.msra.mxu0 0.0
    %136 = vmatprep.subr.mxu0 0.0
    %137 = vmatpush2.msra.mxu0 0.0
    %138 = vmatprep.subr.mxu0 0.0
    %139 = vmatpush2.msra.mxu0 0.0
    %140 = vmatprep.subr.mxu0 0.0
    %141 = vmatpush2.msra.mxu0 0.0
    %142 = vmatprep.subr.mxu0 0.0
    %143 = vmatpush2.msra.mxu0 0.0
    %144 = vmatprep.subr.mxu0 0.0
    %145 = vmatpush2.msra.mxu0 0.0
    %146 = vmatprep.subr.mxu0 0.0
    %147 = vmatpush2.msra.mxu0 0.0
    %148 = vmatprep.subr.mxu0 0.0
    %149 = vmatpush2.msra.mxu0 0.0
    %150 = vmatprep.subr.mxu0 0.0
    %151 = vmatpush2.msra.mxu0 0.0
    %152 = vmatprep.subr.mxu0 0.0
    %153 = vmatpush2.msra.mxu0 0.0
    %154 = vmatprep.subr.mxu0 0.0
    %155 = vmatpush2.msra.mxu0 0.0
    %156 = vmatprep.subr.mxu0 0.0
    %157 = vmatpush2.msra.mxu0 0.0
    %158 = vmatprep.subr.mxu0 0.0
    %159 = vmatpush2.msra.mxu0 0.0
    %160 = vmatprep.subr.mxu0 0.0
    %161 = vmatpush2.msra.mxu0 0.0
    %162 = vmatprep.subr.mxu0 0.0
    %163 = vmatpush2.msra.mxu0 0.0
    %164 = vmatprep.subr.mxu0 0.0
    %165 = vmatpush2.msra.mxu0 0.0
    %166 = vmatprep.mubr.f32.mxu0 0.0
    %167 = vmatmul.mubr.f32.gmra.mxu0 %v97
    %v168 = vpop.f32.mrf.mxu0
    %v169 = vadd.f32 %v94, %v168
    %v170 = vpop.f32.mrf.mxu0
    %171 = vmatprep.mubr.f32.mxu0 0.0
    %172 = vmatmul.mubr.f32.gmra.mxu0 %v100
    %v173 = vpop.f32.mrf.mxu0
    %v174 = vadd.f32 %v94, %v173
    %v175 = vpop.f32.mrf.mxu0
    %176 = vdwg.mxu0
    %v178 = vsel %vm95, %v169, 0
    %v181 = vsel %vm95, %v174, 0
    %183 = vmatprep.subr.mxu0 0.0
    %184 = vmatpush1.xpose.msra.mxu0 0.0
    %185 = vmatprep.subr.mxu0 0.0
    %186 = vmatpush1.xpose.msra.mxu0 0.0
    %187 = vmatprep.subr.mxu0 0.0
    %188 = vmatpush1.xpose.msra.mxu0 0.0
    %189 = vmatprep.subr.mxu0 0.0
    %190 = vmatpush1.xpose.msra.mxu0 0.0
    %191 = vmatprep.subr.mxu0 0.0
    %192 = vmatpush1.xpose.msra.mxu0 0.0
    %193 = vmatprep.subr.mxu0 0.0
    %194 = vmatpush1.xpose.msra.mxu0 0.0
    %195 = vmatprep.subr.mxu0 0.0
    %196 = vmatpush1.xpose.msra.mxu0 0.0
    %197 = vmatprep.subr.mxu0 0.0
    %198 = vmatpush1.xpose.msra.mxu0 0.0
    %199 = vmatprep.subr.mxu0 0.0
    %200 = vmatpush1.xpose.msra.mxu0 0.0
    %201 = vmatprep.subr.mxu0 0.0
    %202 = vmatpush1.xpose.msra.mxu0 0.0
    %203 = vmatprep.subr.mxu0 0.0
    %204 = vmatpush1.xpose.msra.mxu0 0.0
    %205 = vmatprep.subr.mxu0 0.0
    %206 = vmatpush1.xpose.msra.mxu0 0.0
    %207 = vmatprep.subr.mxu0 0.0
    %208 = vmatpush1.xpose.msra.mxu0 0.0
    %209 = vmatprep.subr.mxu0 0.0
    %210 = vmatpush1.xpose.msra.mxu0 0.0
    %211 = vmatprep.subr.mxu0 0.0
    %212 = vmatpush1.xpose.msra.mxu0 %v100
    %213 = vmatprep.subr.mxu0 0.0
    %214 = vmatpush1.xpose.msra.mxu0 %v97
    %215 = vmatprep.subr.mxu0 0.0
    %216 = vmatpush2.xpose.msra.mxu0 0.0
    %217 = vmatprep.subr.mxu0 0.0
    %218 = vmatpush2.xpose.msra.mxu0 0.0
    %219 = vmatprep.subr.mxu0 0.0
    %220 = vmatpush2.xpose.msra.mxu0 0.0
    %221 = vmatprep.subr.mxu0 0.0
    %222 = vmatpush2.xpose.msra.mxu0 0.0
    %223 = vmatprep.subr.mxu0 0.0
    %224 = vmatpush2.xpose.msra.mxu0 0.0
    %225 = vmatprep.subr.mxu0 0.0
    %226 = vmatpush2.xpose.msra.mxu0 0.0
    %227 = vmatprep.subr.mxu0 0.0
    %228 = vmatpush2.xpose.msra.mxu0 0.0
    %229 = vmatprep.subr.mxu0 0.0
    %230 = vmatpush2.xpose.msra.mxu0 0.0
    %231 = vmatprep.subr.mxu0 0.0
    %232 = vmatpush2.xpose.msra.mxu0 0.0
    %233 = vmatprep.subr.mxu0 0.0
    %234 = vmatpush2.xpose.msra.mxu0 0.0
    %235 = vmatprep.subr.mxu0 0.0
    %236 = vmatpush2.xpose.msra.mxu0 0.0
    %237 = vmatprep.subr.mxu0 0.0
    %238 = vmatpush2.xpose.msra.mxu0 0.0
    %239 = vmatprep.subr.mxu0 0.0
    %240 = vmatpush2.xpose.msra.mxu0 0.0
    %241 = vmatprep.subr.mxu0 0.0
    %242 = vmatpush2.xpose.msra.mxu0 0.0
    %243 = vmatprep.subr.mxu0 0.0
    %244 = vmatpush2.xpose.msra.mxu0 0.0
    %245 = vmatprep.subr.mxu0 0.0
    %246 = vmatpush2.xpose.msra.mxu0 0.0
    %247 = vmatprep.mubr.f32.mxu0 0.0
    %248 = vmatmul.mubr.f32.gmra.mxu0 %v178
    %v249 = vpop.f32.mrf.mxu0
    %v250 = vadd.f32 %v85, %v249
    %v251 = vpop.f32.mrf.mxu0
    %252 = vmatprep.mubr.f32.mxu0 0.0
    %253 = vmatmul.mubr.f32.gmra.mxu0 %v181
    %v254 = vpop.f32.mrf.mxu0
    %v255 = vadd.f32 %v86, %v254
    %v256 = vpop.f32.mrf.mxu0
    %257 = vdwg.mxu0
    %vm258 = vcmask 130048
    %v259 = vsel %vm258, %v250, -inf
    %260 = vmax.xlane.f32.xlu0 %v259
    %v261 = vpop.xlane.xlu0 %260
    %v262 = vsel %vm258, %v255, -inf
    %263 = vmax.xlane.f32.xlu0 %v262
    %v264 = vpop.xlane.xlu0 %263
    %v265 = vsub.f32 %v250, %v261
    %v266 = vsub.f32 %v255, %v264
    %v267 = vmul.f32 %v265, 1.442695
    %v268 = vpow.pop %v267
    %v269 = vmul.f32 %v266, 1.442695
    %v270 = vpow.pop %v269
    %v271 = vsel %vm258, %v268, 0.0
    %272 = vadd.xlane.f32.xlu0 %v271
    %v273 = vpop.xlane.xlu0 %272
    %v274 = vsel %vm258, %v270, 0.0
    %275 = vadd.xlane.f32.xlu0 %v274
    %v276 = vpop.xlane.xlu0 %275
    %v277 = vrcp.pop %v273
    %v278 = vrcp.pop %v276
    %v279 = vmul.f32 %v268, %v277
    %v280 = vmul.f32 %v270, %v278
    %v282 = vsel %vm258, %v279, 0
    %v285 = vsel %vm258, %v280, 0
    %287 = vmatprep.subr.mxu0 0.0
    %288 = vmatpush1.msra.mxu0 0.0
    %289 = vmatprep.subr.mxu0 0.0
    %290 = vmatpush1.msra.mxu0 0.0
    %291 = vmatprep.subr.mxu0 0.0
    %292 = vmatpush1.msra.mxu0 0.0
    %293 = vmatprep.subr.mxu0 0.0
    %294 = vmatpush1.msra.mxu0 0.0
    %295 = vmatprep.subr.mxu0 0.0
    %296 = vmatpush1.msra.mxu0 0.0
    %297 = vmatprep.subr.mxu0 0.0
    %298 = vmatpush1.msra.mxu0 0.0
    %299 = vmatprep.subr.mxu0 0.0
    %300 = vmatpush1.msra.mxu0 0.0
    %301 = vmatprep.subr.mxu0 0.0
    %302 = vmatpush1.msra.mxu0 0.0
    %303 = vmatprep.subr.mxu0 0.0
    %304 = vmatpush1.msra.mxu0 0.0
    %305 = vmatprep.subr.mxu0 0.0
    %306 = vmatpush1.msra.mxu0 0.0
    %307 = vmatprep.subr.mxu0 0.0
    %308 = vmatpush1.msra.mxu0 0.0
    %309 = vmatprep.subr.mxu0 0.0
    %310 = vmatpush1.msra.mxu0 0.0
    %311 = vmatprep.subr.mxu0 0.0
    %312 = vmatpush1.msra.mxu0 0.0
    %313 = vmatprep.subr.mxu0 0.0
    %314 = vmatpush1.msra.mxu0 0.0
    %315 = vmatprep.subr.mxu0 0.0
    %316 = vmatpush1.msra.mxu0 %v39
    %317 = vmatprep.subr.mxu0 0.0
    %318 = vmatpush1.msra.mxu0 %v38
    %319 = vmatprep.subr.mxu0 0.0
    %320 = vmatpush2.msra.mxu0 0.0
    %321 = vmatprep.subr.mxu0 0.0
    %322 = vmatpush2.msra.mxu0 0.0
    %323 = vmatprep.subr.mxu0 0.0
    %324 = vmatpush2.msra.mxu0 0.0
    %325 = vmatprep.subr.mxu0 0.0
    %326 = vmatpush2.msra.mxu0 0.0
    %327 = vmatprep.subr.mxu0 0.0
    %328 = vmatpush2.msra.mxu0 0.0
    %329 = vmatprep.subr.mxu0 0.0
    %330 = vmatpush2.msra.mxu0 0.0
    %331 = vmatprep.subr.mxu0 0.0
    %332 = vmatpush2.msra.mxu0 0.0
    %333 = vmatprep.subr.mxu0 0.0
    %334 = vmatpush2.msra.mxu0 0.0
    %335 = vmatprep.subr.mxu0 0.0
    %336 = vmatpush2.msra.mxu0 0.0
    %337 = vmatprep.subr.mxu0 0.0
    %338 = vmatpush2.msra.mxu0 0.0
    %339 = vmatprep.subr.mxu0 0.0
    %340 = vmatpush2.msra.mxu0 0.0
    %341 = vmatprep.subr.mxu0 0.0
    %342 = vmatpush2.msra.mxu0 0.0
    %343 = vmatprep.subr.mxu0 0.0
    %344 = vmatpush2.msra.mxu0 0.0
    %345 = vmatprep.subr.mxu0 0.0
    %346 = vmatpush2.msra.mxu0 0.0
    %347 = vmatprep.subr.mxu0 0.0
    %348 = vmatpush2.msra.mxu0 0.0
    %349 = vmatprep.subr.mxu0 0.0
    %350 = vmatpush2.msra.mxu0 0.0
    %351 = vmatprep.mubr.f32.mxu0 0.0
    %352 = vmatmul.mubr.f32.gmra.mxu0 %v282
    %v353 = vpop.f32.mrf.mxu0
    %v354 = vadd.f32 0.0, %v353
    %v355 = vpop.f32.mrf.mxu0
    %356 = vmatprep.mubr.f32.mxu0 0.0
    %357 = vmatmul.mubr.f32.gmra.mxu0 %v285
    %v358 = vpop.f32.mrf.mxu0
    %v359 = vadd.f32 0.0, %v358
    %v360 = vpop.f32.mrf.mxu0
    %361 = vdwg.mxu0
    %s362 = scalar_lea.vmem [#allocation2], 128
    %v363 = vld [vmem:[%s362] sm:$0xff]
    %v364 = vld [vmem:[%s362 + $0x8] sm:$0xff]
    %v365 = vld [vmem:[%s362 + $0x10] sm:$0xff]
    %v366 = vld [vmem:[%s362 + $0x18] sm:$0xff]
    %s367 = scalar_lea.vmem [#allocation2], 32
    %v368 = vld [vmem:[%s367] sm:$0xff]
    %v369 = vld [vmem:[%s367 + $0x8] sm:$0xff]
    %v370 = vld [vmem:[%s367 + $0x10] sm:$0xff]
    %v371 = vld [vmem:[%s367 + $0x18] sm:$0xff]
    %v372 = vlaneseq
    %v373 = vshrl.u32 %v372, 7
    %v374 = vsub.s32 1, %v373
    %v375 = vrot.slane %v40, %v374
    %376 = vmatprep.subr.mxu0 0.0
    %377 = vmatpush1.msra.mxu0 0.0
    %378 = vmatprep.subr.mxu0 0.0
    %379 = vmatpush1.msra.mxu0 0.0
    %380 = vmatprep.subr.mxu0 0.0
    %381 = vmatpush1.msra.mxu0 0.0
    %382 = vmatprep.subr.mxu0 0.0
    %383 = vmatpush1.msra.mxu0 0.0
    %384 = vmatprep.subr.mxu0 0.0
    %385 = vmatpush1.msra.mxu0 0.0
    %386 = vmatprep.subr.mxu0 0.0
    %387 = vmatpush1.msra.mxu0 0.0
    %388 = vmatprep.subr.mxu0 0.0
    %389 = vmatpush1.msra.mxu0 0.0
    %390 = vmatprep.subr.mxu0 0.0
    %391 = vmatpush1.msra.mxu0 0.0
    %392 = vmatprep.subr.mxu0 0.0
    %393 = vmatpush1.msra.mxu0 0.0
    %394 = vmatprep.subr.mxu0 0.0
    %395 = vmatpush1.msra.mxu0 0.0
    %396 = vmatprep.subr.mxu0 0.0
    %397 = vmatpush1.msra.mxu0 0.0
    %398 = vmatprep.subr.mxu0 0.0
    %399 = vmatpush1.msra.mxu0 0.0
    %400 = vmatprep.subr.mxu0 0.0
    %401 = vmatpush1.msra.mxu0 %v371
    %402 = vmatprep.subr.mxu0 0.0
    %403 = vmatpush1.msra.mxu0 %v370
    %404 = vmatprep.subr.mxu0 0.0
    %405 = vmatpush1.msra.mxu0 %v369
    %406 = vmatprep.subr.mxu0 0.0
    %407 = vmatpush1.msra.mxu0 %v368
    %408 = vmatprep.subr.mxu0 0.0
    %409 = vmatpush2.msra.mxu0 0.0
    %410 = vmatprep.subr.mxu0 0.0
    %411 = vmatpush2.msra.mxu0 0.0
    %412 = vmatprep.subr.mxu0 0.0
    %413 = vmatpush2.msra.mxu0 0.0
    %414 = vmatprep.subr.mxu0 0.0
    %415 = vmatpush2.msra.mxu0 0.0
    %416 = vmatprep.subr.mxu0 0.0
    %417 = vmatpush2.msra.mxu0 0.0
    %418 = vmatprep.subr.mxu0 0.0
    %419 = vmatpush2.msra.mxu0 0.0
    %420 = vmatprep.subr.mxu0 0.0
    %421 = vmatpush2.msra.mxu0 0.0
    %422 = vmatprep.subr.mxu0 0.0
    %423 = vmatpush2.msra.mxu0 0.0
    %424 = vmatprep.subr.mxu0 0.0
    %425 = vmatpush2.msra.mxu0 0.0
    %426 = vmatprep.subr.mxu0 0.0
    %427 = vmatpush2.msra.mxu0 0.0
    %428 = vmatprep.subr.mxu0 0.0
    %429 = vmatpush2.msra.mxu0 0.0
    %430 = vmatprep.subr.mxu0 0.0
    %431 = vmatpush2.msra.mxu0 0.0
    %432 = vmatprep.subr.mxu0 0.0
    %433 = vmatpush2.msra.mxu0 0.0
    %434 = vmatprep.subr.mxu0 0.0
    %435 = vmatpush2.msra.mxu0 0.0
    %436 = vmatprep.subr.mxu0 0.0
    %437 = vmatpush2.msra.mxu0 0.0
    %438 = vmatprep.subr.mxu0 0.0
    %439 = vmatpush2.msra.mxu0 0.0
    %440 = vmatprep.mubr.f32.mxu0 0.0
    %441 = vmatmul.mubr.f32.gmra.mxu0 %v97
    %v442 = vpop.f32.mrf.mxu0
    %v443 = vadd.f32 %v375, %v442
    %v444 = vpop.f32.mrf.mxu0
    %445 = vmatprep.mubr.f32.mxu0 0.0
    %446 = vmatmul.mubr.f32.gmra.mxu0 %v100
    %v447 = vpop.f32.mrf.mxu0
    %v448 = vadd.f32 %v375, %v447
    %v449 = vpop.f32.mrf.mxu0
    %450 = vdwg.mxu0
    %v452 = vsel %vm95, %v443, 0
    %v455 = vsel %vm95, %v448, 0
    %457 = vmatprep.subr.mxu0 0.0
    %458 = vmatpush1.xpose.msra.mxu0 0.0
    %459 = vmatprep.subr.mxu0 0.0
    %460 = vmatpush1.xpose.msra.mxu0 0.0
    %461 = vmatprep.subr.mxu0 0.0
    %462 = vmatpush1.xpose.msra.mxu0 0.0
    %463 = vmatprep.subr.mxu0 0.0
    %464 = vmatpush1.xpose.msra.mxu0 0.0
    %465 = vmatprep.subr.mxu0 0.0
    %466 = vmatpush1.xpose.msra.mxu0 0.0
    %467 = vmatprep.subr.mxu0 0.0
    %468 = vmatpush1.xpose.msra.mxu0 0.0
    %469 = vmatprep.subr.mxu0 0.0
    %470 = vmatpush1.xpose.msra.mxu0 0.0
    %471 = vmatprep.subr.mxu0 0.0
    %472 = vmatpush1.xpose.msra.mxu0 0.0
    %473 = vmatprep.subr.mxu0 0.0
    %474 = vmatpush1.xpose.msra.mxu0 0.0
    %475 = vmatprep.subr.mxu0 0.0
    %476 = vmatpush1.xpose.msra.mxu0 0.0
    %477 = vmatprep.subr.mxu0 0.0
    %478 = vmatpush1.xpose.msra.mxu0 0.0
    %479 = vmatprep.subr.mxu0 0.0
    %480 = vmatpush1.xpose.msra.mxu0 0.0
    %481 = vmatprep.subr.mxu0 0.0
    %482 = vmatpush1.xpose.msra.mxu0 0.0
    %483 = vmatprep.subr.mxu0 0.0
    %484 = vmatpush1.xpose.msra.mxu0 0.0
    %485 = vmatprep.subr.mxu0 0.0
    %486 = vmatpush1.xpose.msra.mxu0 %v100
    %487 = vmatprep.subr.mxu0 0.0
    %488 = vmatpush1.xpose.msra.mxu0 %v97
    %489 = vmatprep.subr.mxu0 0.0
    %490 = vmatpush2.xpose.msra.mxu0 0.0
    %491 = vmatprep.subr.mxu0 0.0
    %492 = vmatpush2.xpose.msra.mxu0 0.0
    %493 = vmatprep.subr.mxu0 0.0
    %494 = vmatpush2.xpose.msra.mxu0 0.0
    %495 = vmatprep.subr.mxu0 0.0
    %496 = vmatpush2.xpose.msra.mxu0 0.0
    %497 = vmatprep.subr.mxu0 0.0
    %498 = vmatpush2.xpose.msra.mxu0 0.0
    %499 = vmatprep.subr.mxu0 0.0
    %500 = vmatpush2.xpose.msra.mxu0 0.0
    %501 = vmatprep.subr.mxu0 0.0
    %502 = vmatpush2.xpose.msra.mxu0 0.0
    %503 = vmatprep.subr.mxu0 0.0
    %504 = vmatpush2.xpose.msra.mxu0 0.0
    %505 = vmatprep.subr.mxu0 0.0
    %506 = vmatpush2.xpose.msra.mxu0 0.0
    %507 = vmatprep.subr.mxu0 0.0
    %508 = vmatpush2.xpose.msra.mxu0 0.0
    %509 = vmatprep.subr.mxu0 0.0
    %510 = vmatpush2.xpose.msra.mxu0 0.0
    %511 = vmatprep.subr.mxu0 0.0
    %512 = vmatpush2.xpose.msra.mxu0 0.0
    %513 = vmatprep.subr.mxu0 0.0
    %514 = vmatpush2.xpose.msra.mxu0 0.0
    %515 = vmatprep.subr.mxu0 0.0
    %516 = vmatpush2.xpose.msra.mxu0 0.0
    %517 = vmatprep.subr.mxu0 0.0
    %518 = vmatpush2.xpose.msra.mxu0 0.0
    %519 = vmatprep.subr.mxu0 0.0
    %520 = vmatpush2.xpose.msra.mxu0 0.0
    %521 = vmatprep.mubr.f32.mxu0 0.0
    %522 = vmatmul.mubr.f32.gmra.mxu0 %v452
    %v523 = vpop.f32.mrf.mxu0
    %v524 = vadd.f32 %v85, %v523
    %v525 = vpop.f32.mrf.mxu0
    %526 = vmatprep.mubr.f32.mxu0 0.0
    %527 = vmatmul.mubr.f32.gmra.mxu0 %v455
    %v528 = vpop.f32.mrf.mxu0
    %v529 = vadd.f32 %v86, %v528
    %v530 = vpop.f32.mrf.mxu0
    %531 = vdwg.mxu0
    %v532 = vsel %vm258, %v524, -inf
    %533 = vmax.xlane.f32.xlu0 %v532
    %v534 = vpop.xlane.xlu0 %533
    %v535 = vsel %vm258, %v529, -inf
    %536 = vmax.xlane.f32.xlu0 %v535
    %v537 = vpop.xlane.xlu0 %536
    %v538 = vsub.f32 %v524, %v534
    %v539 = vsub.f32 %v529, %v537
    %v540 = vmul.f32 %v538, 1.442695
    %v541 = vpow.pop %v540
    %v542 = vmul.f32 %v539, 1.442695
    %v543 = vpow.pop %v542
    %v544 = vsel %vm258, %v541, 0.0
    %545 = vadd.xlane.f32.xlu0 %v544
    %v546 = vpop.xlane.xlu0 %545
    %v547 = vsel %vm258, %v543, 0.0
    %548 = vadd.xlane.f32.xlu0 %v547
    %v549 = vpop.xlane.xlu0 %548
    %v550 = vrcp.pop %v546
    %v551 = vrcp.pop %v549
    %v552 = vmul.f32 %v541, %v550
    %v553 = vmul.f32 %v543, %v551
    %v555 = vsel %vm258, %v552, 0
    %v558 = vsel %vm258, %v553, 0
    %560 = vmatprep.subr.mxu0 0.0
    %561 = vmatpush1.msra.mxu0 0.0
    %562 = vmatprep.subr.mxu0 0.0
    %563 = vmatpush1.msra.mxu0 0.0
    %564 = vmatprep.subr.mxu0 0.0
    %565 = vmatpush1.msra.mxu0 0.0
    %566 = vmatprep.subr.mxu0 0.0
    %567 = vmatpush1.msra.mxu0 0.0
    %568 = vmatprep.subr.mxu0 0.0
    %569 = vmatpush1.msra.mxu0 0.0
    %570 = vmatprep.subr.mxu0 0.0
    %571 = vmatpush1.msra.mxu0 0.0
    %572 = vmatprep.subr.mxu0 0.0
    %573 = vmatpush1.msra.mxu0 0.0
    %574 = vmatprep.subr.mxu0 0.0
    %575 = vmatpush1.msra.mxu0 0.0
    %576 = vmatprep.subr.mxu0 0.0
    %577 = vmatpush1.msra.mxu0 0.0
    %578 = vmatprep.subr.mxu0 0.0
    %579 = vmatpush1.msra.mxu0 0.0
    %580 = vmatprep.subr.mxu0 0.0
    %581 = vmatpush1.msra.mxu0 0.0
    %582 = vmatprep.subr.mxu0 0.0
    %583 = vmatpush1.msra.mxu0 0.0
    %584 = vmatprep.subr.mxu0 0.0
    %585 = vmatpush1.msra.mxu0 0.0
    %586 = vmatprep.subr.mxu0 0.0
    %587 = vmatpush1.msra.mxu0 0.0
    %588 = vmatprep.subr.mxu0 0.0
    %589 = vmatpush1.msra.mxu0 %v39
    %590 = vmatprep.subr.mxu0 0.0
    %591 = vmatpush1.msra.mxu0 %v38
    %592 = vmatprep.subr.mxu0 0.0
    %593 = vmatpush2.msra.mxu0 0.0
    %594 = vmatprep.subr.mxu0 0.0
    %595 = vmatpush2.msra.mxu0 0.0
    %596 = vmatprep.subr.mxu0 0.0
    %597 = vmatpush2.msra.mxu0 0.0
    %598 = vmatprep.subr.mxu0 0.0
    %599 = vmatpush2.msra.mxu0 0.0
    %600 = vmatprep.subr.mxu0 0.0
    %601 = vmatpush2.msra.mxu0 0.0
    %602 = vmatprep.subr.mxu0 0.0
    %603 = vmatpush2.msra.mxu0 0.0
    %604 = vmatprep.subr.mxu0 0.0
    %605 = vmatpush2.msra.mxu0 0.0
    %606 = vmatprep.subr.mxu0 0.0
    %607 = vmatpush2.msra.mxu0 0.0
    %608 = vmatprep.subr.mxu0 0.0
    %609 = vmatpush2.msra.mxu0 0.0
    %610 = vmatprep.subr.mxu0 0.0
    %611 = vmatpush2.msra.mxu0 0.0
    %612 = vmatprep.subr.mxu0 0.0
    %613 = vmatpush2.msra.mxu0 0.0
    %614 = vmatprep.subr.mxu0 0.0
    %615 = vmatpush2.msra.mxu0 0.0
    %616 = vmatprep.subr.mxu0 0.0
    %617 = vmatpush2.msra.mxu0 0.0
    %618 = vmatprep.subr.mxu0 0.0
    %619 = vmatpush2.msra.mxu0 0.0
    %620 = vmatprep.subr.mxu0 0.0
    %621 = vmatpush2.msra.mxu0 0.0
    %622 = vmatprep.subr.mxu0 0.0
    %623 = vmatpush2.msra.mxu0 0.0
    %624 = vmatprep.mubr.f32.mxu0 0.0
    %625 = vmatmul.mubr.f32.gmra.mxu0 %v555
    %v626 = vpop.f32.mrf.mxu0
    %v627 = vadd.f32 0.0, %v626
    %v628 = vpop.f32.mrf.mxu0
    %629 = vmatprep.mubr.f32.mxu0 0.0
    %630 = vmatmul.mubr.f32.gmra.mxu0 %v558
    %v631 = vpop.f32.mrf.mxu0
    %v632 = vadd.f32 0.0, %v631
    %v633 = vpop.f32.mrf.mxu0
    %634 = vdwg.mxu0
    %s635 = scalar_lea.vmem [#allocation2], 160
    %v636 = vld [vmem:[%s635] sm:$0xff]
    %v637 = vld [vmem:[%s635 + $0x8] sm:$0xff]
    %v638 = vld [vmem:[%s635 + $0x10] sm:$0xff]
    %v639 = vld [vmem:[%s635 + $0x18] sm:$0xff]
    %v641 = vsel %vm95, %v627, 0
    %v644 = vsel %vm95, %v632, 0
    %646 = vmatprep.subr.mxu0 0.0
    %647 = vmatpush1.msra.mxu0 0.0
    %648 = vmatprep.subr.mxu0 0.0
    %649 = vmatpush1.msra.mxu0 0.0
    %650 = vmatprep.subr.mxu0 0.0
    %651 = vmatpush1.msra.mxu0 0.0
    %652 = vmatprep.subr.mxu0 0.0
    %653 = vmatpush1.msra.mxu0 0.0
    %654 = vmatprep.subr.mxu0 0.0
    %655 = vmatpush1.msra.mxu0 0.0
    %656 = vmatprep.subr.mxu0 0.0
    %657 = vmatpush1.msra.mxu0 0.0
    %658 = vmatprep.subr.mxu0 0.0
    %659 = vmatpush1.msra.mxu0 0.0
    %660 = vmatprep.subr.mxu0 0.0
    %661 = vmatpush1.msra.mxu0 0.0
    %662 = vmatprep.subr.mxu0 0.0
    %663 = vmatpush1.msra.mxu0 0.0
    %664 = vmatprep.subr.mxu0 0.0
    %665 = vmatpush1.msra.mxu0 0.0
    %666 = vmatprep.subr.mxu0 0.0
    %667 = vmatpush1.msra.mxu0 0.0
    %668 = vmatprep.subr.mxu0 0.0
    %669 = vmatpush1.msra.mxu0 0.0
    %670 = vmatprep.subr.mxu0 0.0
    %671 = vmatpush1.msra.mxu0 %v639
    %672 = vmatprep.subr.mxu0 0.0
    %673 = vmatpush1.msra.mxu0 %v638
    %674 = vmatprep.subr.mxu0 0.0
    %675 = vmatpush1.msra.mxu0 %v637
    %676 = vmatprep.subr.mxu0 0.0
    %677 = vmatpush1.msra.mxu0 %v636
    %678 = vmatprep.subr.mxu0 0.0
    %679 = vmatpush2.msra.mxu0 0.0
    %680 = vmatprep.subr.mxu0 0.0
    %681 = vmatpush2.msra.mxu0 0.0
    %682 = vmatprep.subr.mxu0 0.0
    %683 = vmatpush2.msra.mxu0 0.0
    %684 = vmatprep.subr.mxu0 0.0
    %685 = vmatpush2.msra.mxu0 0.0
    %686 = vmatprep.subr.mxu0 0.0
    %687 = vmatpush2.msra.mxu0 0.0
    %688 = vmatprep.subr.mxu0 0.0
    %689 = vmatpush2.msra.mxu0 0.0
    %690 = vmatprep.subr.mxu0 0.0
    %691 = vmatpush2.msra.mxu0 0.0
    %692 = vmatprep.subr.mxu0 0.0
    %693 = vmatpush2.msra.mxu0 0.0
    %694 = vmatprep.subr.mxu0 0.0
    %695 = vmatpush2.msra.mxu0 0.0
    %696 = vmatprep.subr.mxu0 0.0
    %697 = vmatpush2.msra.mxu0 0.0
    %698 = vmatprep.subr.mxu0 0.0
    %699 = vmatpush2.msra.mxu0 0.0
    %700 = vmatprep.subr.mxu0 0.0
    %701 = vmatpush2.msra.mxu0 0.0
    %702 = vmatprep.subr.mxu0 0.0
    %703 = vmatpush2.msra.mxu0 0.0
    %704 = vmatprep.subr.mxu0 0.0
    %705 = vmatpush2.msra.mxu0 0.0
    %706 = vmatprep.subr.mxu0 0.0
    %707 = vmatpush2.msra.mxu0 0.0
    %708 = vmatprep.subr.mxu0 0.0
    %709 = vmatpush2.msra.mxu0 0.0
    %710 = vmatprep.mubr.f32.mxu0 0.0
    %711 = vmatmul.mubr.f32.gmra.mxu0 %v641
    %v712 = vpop.f32.mrf.mxu0
    %v713 = vadd.f32 0.0, %v712
    %v714 = vpop.f32.mrf.mxu0
    %715 = vmatprep.mubr.f32.mxu0 0.0
    %716 = vmatmul.mubr.f32.gmra.mxu0 %v644
    %v717 = vpop.f32.mrf.mxu0
    %v718 = vadd.f32 0.0, %v717
    %v719 = vpop.f32.mrf.mxu0
    %720 = vdwg.mxu0
    %v722 = vsel %vm95, %v354, 0
    %v725 = vsel %vm95, %v359, 0
    %727 = vmatprep.subr.mxu0 0.0
    %728 = vmatpush1.msra.mxu0 0.0
    %729 = vmatprep.subr.mxu0 0.0
    %730 = vmatpush1.msra.mxu0 0.0
    %731 = vmatprep.subr.mxu0 0.0
    %732 = vmatpush1.msra.mxu0 0.0
    %733 = vmatprep.subr.mxu0 0.0
    %734 = vmatpush1.msra.mxu0 0.0
    %735 = vmatprep.subr.mxu0 0.0
    %736 = vmatpush1.msra.mxu0 0.0
    %737 = vmatprep.subr.mxu0 0.0
    %738 = vmatpush1.msra.mxu0 0.0
    %739 = vmatprep.subr.mxu0 0.0
    %740 = vmatpush1.msra.mxu0 0.0
    %741 = vmatprep.subr.mxu0 0.0
    %742 = vmatpush1.msra.mxu0 0.0
    %743 = vmatprep.subr.mxu0 0.0
    %744 = vmatpush1.msra.mxu0 0.0
    %745 = vmatprep.subr.mxu0 0.0
    %746 = vmatpush1.msra.mxu0 0.0
    %747 = vmatprep.subr.mxu0 0.0
    %748 = vmatpush1.msra.mxu0 0.0
    %749 = vmatprep.subr.mxu0 0.0
    %750 = vmatpush1.msra.mxu0 0.0
    %751 = vmatprep.subr.mxu0 0.0
    %752 = vmatpush1.msra.mxu0 %v366
    %753 = vmatprep.subr.mxu0 0.0
    %754 = vmatpush1.msra.mxu0 %v365
    %755 = vmatprep.subr.mxu0 0.0
    %756 = vmatpush1.msra.mxu0 %v364
    %757 = vmatprep.subr.mxu0 0.0
    %758 = vmatpush1.msra.mxu0 %v363
    %759 = vmatprep.subr.mxu0 0.0
    %760 = vmatpush2.msra.mxu0 0.0
    %761 = vmatprep.subr.mxu0 0.0
    %762 = vmatpush2.msra.mxu0 0.0
    %763 = vmatprep.subr.mxu0 0.0
    %764 = vmatpush2.msra.mxu0 0.0
    %765 = vmatprep.subr.mxu0 0.0
    %766 = vmatpush2.msra.mxu0 0.0
    %767 = vmatprep.subr.mxu0 0.0
    %768 = vmatpush2.msra.mxu0 0.0
    %769 = vmatprep.subr.mxu0 0.0
    %770 = vmatpush2.msra.mxu0 0.0
    %771 = vmatprep.subr.mxu0 0.0
    %772 = vmatpush2.msra.mxu0 0.0
    %773 = vmatprep.subr.mxu0 0.0
    %774 = vmatpush2.msra.mxu0 0.0
    %775 = vmatprep.subr.mxu0 0.0
    %776 = vmatpush2.msra.mxu0 0.0
    %777 = vmatprep.subr.mxu0 0.0
    %778 = vmatpush2.msra.mxu0 0.0
    %779 = vmatprep.subr.mxu0 0.0
    %780 = vmatpush2.msra.mxu0 0.0
    %781 = vmatprep.subr.mxu0 0.0
    %782 = vmatpush2.msra.mxu0 0.0
    %783 = vmatprep.subr.mxu0 0.0
    %784 = vmatpush2.msra.mxu0 0.0
    %785 = vmatprep.subr.mxu0 0.0
    %786 = vmatpush2.msra.mxu0 0.0
    %787 = vmatprep.subr.mxu0 0.0
    %788 = vmatpush2.msra.mxu0 0.0
    %789 = vmatprep.subr.mxu0 0.0
    %790 = vmatpush2.msra.mxu0 0.0
    %791 = vmatprep.mubr.f32.mxu0 0.0
    %792 = vmatmul.mubr.f32.gmra.mxu0 %v722
    %v793 = vpop.f32.mrf.mxu0
    %v794 = vadd.f32 %v713, %v793
    %v795 = vpop.f32.mrf.mxu0
    %796 = vmatprep.mubr.f32.mxu0 0.0
    %797 = vmatmul.mubr.f32.gmra.mxu0 %v725
    %v798 = vpop.f32.mrf.mxu0
    %v799 = vadd.f32 %v718, %v798
    %v800 = vpop.f32.mrf.mxu0
    %801 = vdwg.mxu0
    %s802 = scalar_lea.vmem [#allocation2], 64
    %v803 = vld [vmem:[%s802] sm:$0xff]
    %v804 = vld [vmem:[%s802 + $0x8] sm:$0xff]
    %v805 = vld [vmem:[%s802 + $0x10] sm:$0xff]
    %v806 = vld [vmem:[%s802 + $0x18] sm:$0xff]
    %v807 = vlaneseq
    %v808 = vshrl.u32 %v807, 7
    %v809 = vsub.s32 2, %v808
    %v810 = vrot.slane %v40, %v809
    %811 = vmatprep.subr.mxu0 0.0
    %812 = vmatpush1.msra.mxu0 0.0
    %813 = vmatprep.subr.mxu0 0.0
    %814 = vmatpush1.msra.mxu0 0.0
    %815 = vmatprep.subr.mxu0 0.0
    %816 = vmatpush1.msra.mxu0 0.0
    %817 = vmatprep.subr.mxu0 0.0
    %818 = vmatpush1.msra.mxu0 0.0
    %819 = vmatprep.subr.mxu0 0.0
    %820 = vmatpush1.msra.mxu0 0.0
    %821 = vmatprep.subr.mxu0 0.0
    %822 = vmatpush1.msra.mxu0 0.0
    %823 = vmatprep.subr.mxu0 0.0
    %824 = vmatpush1.msra.mxu0 0.0
    %825 = vmatprep.subr.mxu0 0.0
    %826 = vmatpush1.msra.mxu0 0.0
    %827 = vmatprep.subr.mxu0 0.0
    %828 = vmatpush1.msra.mxu0 0.0
    %829 = vmatprep.subr.mxu0 0.0
    %830 = vmatpush1.msra.mxu0 0.0
    %831 = vmatprep.subr.mxu0 0.0
    %832 = vmatpush1.msra.mxu0 0.0
    %833 = vmatprep.subr.mxu0 0.0
    %834 = vmatpush1.msra.mxu0 0.0
    %835 = vmatprep.subr.mxu0 0.0
    %836 = vmatpush1.msra.mxu0 %v806
    %837 = vmatprep.subr.mxu0 0.0
    %838 = vmatpush1.msra.mxu0 %v805
    %839 = vmatprep.subr.mxu0 0.0
    %840 = vmatpush1.msra.mxu0 %v804
    %841 = vmatprep.subr.mxu0 0.0
    %842 = vmatpush1.msra.mxu0 %v803
    %843 = vmatprep.subr.mxu0 0.0
    %844 = vmatpush2.msra.mxu0 0.0
    %845 = vmatprep.subr.mxu0 0.0
    %846 = vmatpush2.msra.mxu0 0.0
    %847 = vmatprep.subr.mxu0 0.0
    %848 = vmatpush2.msra.mxu0 0.0
    %849 = vmatprep.subr.mxu0 0.0
    %850 = vmatpush2.msra.mxu0 0.0
    %851 = vmatprep.subr.mxu0 0.0
    %852 = vmatpush2.msra.mxu0 0.0
    %853 = vmatprep.subr.mxu0 0.0
    %854 = vmatpush2.msra.mxu0 0.0
    %855 = vmatprep.subr.mxu0 0.0
    %856 = vmatpush2.msra.mxu0 0.0
    %857 = vmatprep.subr.mxu0 0.0
    %858 = vmatpush2.msra.mxu0 0.0
    %859 = vmatprep.subr.mxu0 0.0
    %860 = vmatpush2.msra.mxu0 0.0
    %861 = vmatprep.subr.mxu0 0.0
    %862 = vmatpush2.msra.mxu0 0.0
    %863 = vmatprep.subr.mxu0 0.0
    %864 = vmatpush2.msra.mxu0 0.0
    %865 = vmatprep.subr.mxu0 0.0
    %866 = vmatpush2.msra.mxu0 0.0
    %867 = vmatprep.subr.mxu0 0.0
    %868 = vmatpush2.msra.mxu0 0.0
    %869 = vmatprep.subr.mxu0 0.0
    %870 = vmatpush2.msra.mxu0 0.0
    %871 = vmatprep.subr.mxu0 0.0
    %872 = vmatpush2.msra.mxu0 0.0
    %873 = vmatprep.subr.mxu0 0.0
    %874 = vmatpush2.msra.mxu0 0.0
    %875 = vmatprep.mubr.f32.mxu0 0.0
    %876 = vmatmul.mubr.f32.gmra.mxu0 %v97
    %v877 = vpop.f32.mrf.mxu0
    %v878 = vadd.f32 %v810, %v877
    %v879 = vpop.f32.mrf.mxu0
    %880 = vmatprep.mubr.f32.mxu0 0.0
    %881 = vmatmul.mubr.f32.gmra.mxu0 %v100
    %v882 = vpop.f32.mrf.mxu0
    %v883 = vadd.f32 %v810, %v882
    %v884 = vpop.f32.mrf.mxu0
    %885 = vdwg.mxu0
    %v887 = vsel %vm95, %v878, 0
    %v890 = vsel %vm95, %v883, 0
    %892 = vmatprep.subr.mxu0 0.0
    %893 = vmatpush1.xpose.msra.mxu0 0.0
    %894 = vmatprep.subr.mxu0 0.0
    %895 = vmatpush1.xpose.msra.mxu0 0.0
    %896 = vmatprep.subr.mxu0 0.0
    %897 = vmatpush1.xpose.msra.mxu0 0.0
    %898 = vmatprep.subr.mxu0 0.0
    %899 = vmatpush1.xpose.msra.mxu0 0.0
    %900 = vmatprep.subr.mxu0 0.0
    %901 = vmatpush1.xpose.msra.mxu0 0.0
    %902 = vmatprep.subr.mxu0 0.0
    %903 = vmatpush1.xpose.msra.mxu0 0.0
    %904 = vmatprep.subr.mxu0 0.0
    %905 = vmatpush1.xpose.msra.mxu0 0.0
    %906 = vmatprep.subr.mxu0 0.0
    %907 = vmatpush1.xpose.msra.mxu0 0.0
    %908 = vmatprep.subr.mxu0 0.0
    %909 = vmatpush1.xpose.msra.mxu0 0.0
    %910 = vmatprep.subr.mxu0 0.0
    %911 = vmatpush1.xpose.msra.mxu0 0.0
    %912 = vmatprep.subr.mxu0 0.0
    %913 = vmatpush1.xpose.msra.mxu0 0.0
    %914 = vmatprep.subr.mxu0 0.0
    %915 = vmatpush1.xpose.msra.mxu0 0.0
    %916 = vmatprep.subr.mxu0 0.0
    %917 = vmatpush1.xpose.msra.mxu0 0.0
    %918 = vmatprep.subr.mxu0 0.0
    %919 = vmatpush1.xpose.msra.mxu0 0.0
    %920 = vmatprep.subr.mxu0 0.0
    %921 = vmatpush1.xpose.msra.mxu0 %v100
    %922 = vmatprep.subr.mxu0 0.0
    %923 = vmatpush1.xpose.msra.mxu0 %v97
    %924 = vmatprep.subr.mxu0 0.0
    %925 = vmatpush2.xpose.msra.mxu0 0.0
    %926 = vmatprep.subr.mxu0 0.0
    %927 = vmatpush2.xpose.msra.mxu0 0.0
    %928 = vmatprep.subr.mxu0 0.0
    %929 = vmatpush2.xpose.msra.mxu0 0.0
    %930 = vmatprep.subr.mxu0 0.0
    %931 = vmatpush2.xpose.msra.mxu0 0.0
    %932 = vmatprep.subr.mxu0 0.0
    %933 = vmatpush2.xpose.msra.mxu0 0.0
    %934 = vmatprep.subr.mxu0 0.0
    %935 = vmatpush2.xpose.msra.mxu0 0.0
    %936 = vmatprep.subr.mxu0 0.0
    %937 = vmatpush2.xpose.msra.mxu0 0.0
    %938 = vmatprep.subr.mxu0 0.0
    %939 = vmatpush2.xpose.msra.mxu0 0.0
    %940 = vmatprep.subr.mxu0 0.0
    %941 = vmatpush2.xpose.msra.mxu0 0.0
    %942 = vmatprep.subr.mxu0 0.0
    %943 = vmatpush2.xpose.msra.mxu0 0.0
    %944 = vmatprep.subr.mxu0 0.0
    %945 = vmatpush2.xpose.msra.mxu0 0.0
    %946 = vmatprep.subr.mxu0 0.0
    %947 = vmatpush2.xpose.msra.mxu0 0.0
    %948 = vmatprep.subr.mxu0 0.0
    %949 = vmatpush2.xpose.msra.mxu0 0.0
    %950 = vmatprep.subr.mxu0 0.0
    %951 = vmatpush2.xpose.msra.mxu0 0.0
    %952 = vmatprep.subr.mxu0 0.0
    %953 = vmatpush2.xpose.msra.mxu0 0.0
    %954 = vmatprep.subr.mxu0 0.0
    %955 = vmatpush2.xpose.msra.mxu0 0.0
    %956 = vmatprep.mubr.f32.mxu0 0.0
    %957 = vmatmul.mubr.f32.gmra.mxu0 %v887
    %v958 = vpop.f32.mrf.mxu0
    %v959 = vadd.f32 %v85, %v958
    %v960 = vpop.f32.mrf.mxu0
    %961 = vmatprep.mubr.f32.mxu0 0.0
    %962 = vmatmul.mubr.f32.gmra.mxu0 %v890
    %v963 = vpop.f32.mrf.mxu0
    %v964 = vadd.f32 %v86, %v963
    %v965 = vpop.f32.mrf.mxu0
    %966 = vdwg.mxu0
    %v967 = vsel %vm258, %v959, -inf
    %968 = vmax.xlane.f32.xlu0 %v967
    %v969 = vpop.xlane.xlu0 %968
    %v970 = vsel %vm258, %v964, -inf
    %971 = vmax.xlane.f32.xlu0 %v970
    %v972 = vpop.xlane.xlu0 %971
    %v973 = vsub.f32 %v959, %v969
    %v974 = vsub.f32 %v964, %v972
    %v975 = vmul.f32 %v973, 1.442695
    %v976 = vpow.pop %v975
    %v977 = vmul.f32 %v974, 1.442695
    %v978 = vpow.pop %v977
    %v979 = vsel %vm258, %v976, 0.0
    %980 = vadd.xlane.f32.xlu0 %v979
    %v981 = vpop.xlane.xlu0 %980
    %v982 = vsel %vm258, %v978, 0.0
    %983 = vadd.xlane.f32.xlu0 %v982
    %v984 = vpop.xlane.xlu0 %983
    %v985 = vrcp.pop %v981
    %v986 = vrcp.pop %v984
    %v987 = vmul.f32 %v976, %v985
    %v988 = vmul.f32 %v978, %v986
    %v990 = vsel %vm258, %v987, 0
    %v993 = vsel %vm258, %v988, 0
    %995 = vmatprep.subr.mxu0 0.0
    %996 = vmatpush1.msra.mxu0 0.0
    %997 = vmatprep.subr.mxu0 0.0
    %998 = vmatpush1.msra.mxu0 0.0
    %999 = vmatprep.subr.mxu0 0.0
    %1000 = vmatpush1.msra.mxu0 0.0
    %1001 = vmatprep.subr.mxu0 0.0
    %1002 = vmatpush1.msra.mxu0 0.0
    %1003 = vmatprep.subr.mxu0 0.0
    %1004 = vmatpush1.msra.mxu0 0.0
    %1005 = vmatprep.subr.mxu0 0.0
    %1006 = vmatpush1.msra.mxu0 0.0
    %1007 = vmatprep.subr.mxu0 0.0
    %1008 = vmatpush1.msra.mxu0 0.0
    %1009 = vmatprep.subr.mxu0 0.0
    %1010 = vmatpush1.msra.mxu0 0.0
    %1011 = vmatprep.subr.mxu0 0.0
    %1012 = vmatpush1.msra.mxu0 0.0
    %1013 = vmatprep.subr.mxu0 0.0
    %1014 = vmatpush1.msra.mxu0 0.0
    %1015 = vmatprep.subr.mxu0 0.0
    %1016 = vmatpush1.msra.mxu0 0.0
    %1017 = vmatprep.subr.mxu0 0.0
    %1018 = vmatpush1.msra.mxu0 0.0
    %1019 = vmatprep.subr.mxu0 0.0
    %1020 = vmatpush1.msra.mxu0 0.0
    %1021 = vmatprep.subr.mxu0 0.0
    %1022 = vmatpush1.msra.mxu0 0.0
    %1023 = vmatprep.subr.mxu0 0.0
    %1024 = vmatpush1.msra.mxu0 %v39
    %1025 = vmatprep.subr.mxu0 0.0
    %1026 = vmatpush1.msra.mxu0 %v38
    %1027 = vmatprep.subr.mxu0 0.0
    %1028 = vmatpush2.msra.mxu0 0.0
    %1029 = vmatprep.subr.mxu0 0.0
    %1030 = vmatpush2.msra.mxu0 0.0
    %1031 = vmatprep.subr.mxu0 0.0
    %1032 = vmatpush2.msra.mxu0 0.0
    %1033 = vmatprep.subr.mxu0 0.0
    %1034 = vmatpush2.msra.mxu0 0.0
    %1035 = vmatprep.subr.mxu0 0.0
    %1036 = vmatpush2.msra.mxu0 0.0
    %1037 = vmatprep.subr.mxu0 0.0
    %1038 = vmatpush2.msra.mxu0 0.0
    %1039 = vmatprep.subr.mxu0 0.0
    %1040 = vmatpush2.msra.mxu0 0.0
    %1041 = vmatprep.subr.mxu0 0.0
    %1042 = vmatpush2.msra.mxu0 0.0
    %1043 = vmatprep.subr.mxu0 0.0
    %1044 = vmatpush2.msra.mxu0 0.0
    %1045 = vmatprep.subr.mxu0 0.0
    %1046 = vmatpush2.msra.mxu0 0.0
    %1047 = vmatprep.subr.mxu0 0.0
    %1048 = vmatpush2.msra.mxu0 0.0
    %1049 = vmatprep.subr.mxu0 0.0
    %1050 = vmatpush2.msra.mxu0 0.0
    %1051 = vmatprep.subr.mxu0 0.0
    %1052 = vmatpush2.msra.mxu0 0.0
    %1053 = vmatprep.subr.mxu0 0.0
    %1054 = vmatpush2.msra.mxu0 0.0
    %1055 = vmatprep.subr.mxu0 0.0
    %1056 = vmatpush2.msra.mxu0 0.0
    %1057 = vmatprep.subr.mxu0 0.0
    %1058 = vmatpush2.msra.mxu0 0.0
    %1059 = vmatprep.mubr.f32.mxu0 0.0
    %1060 = vmatmul.mubr.f32.gmra.mxu0 %v990
    %v1061 = vpop.f32.mrf.mxu0
    %v1062 = vadd.f32 0.0, %v1061
    %v1063 = vpop.f32.mrf.mxu0
    %1064 = vmatprep.mubr.f32.mxu0 0.0
    %1065 = vmatmul.mubr.f32.gmra.mxu0 %v993
    %v1066 = vpop.f32.mrf.mxu0
    %v1067 = vadd.f32 0.0, %v1066
    %v1068 = vpop.f32.mrf.mxu0
    %1069 = vdwg.mxu0
    %s1070 = scalar_lea.vmem [#allocation2], 192
    %v1071 = vld [vmem:[%s1070] sm:$0xff]
    %v1072 = vld [vmem:[%s1070 + $0x8] sm:$0xff]
    %v1073 = vld [vmem:[%s1070 + $0x10] sm:$0xff]
    %v1074 = vld [vmem:[%s1070 + $0x18] sm:$0xff]
    %v1076 = vsel %vm95, %v1062, 0
    %v1079 = vsel %vm95, %v1067, 0
    %1081 = vmatprep.subr.mxu0 0.0
    %1082 = vmatpush1.msra.mxu0 0.0
    %1083 = vmatprep.subr.mxu0 0.0
    %1084 = vmatpush1.msra.mxu0 0.0
    %1085 = vmatprep.subr.mxu0 0.0
    %1086 = vmatpush1.msra.mxu0 0.0
    %1087 = vmatprep.subr.mxu0 0.0
    %1088 = vmatpush1.msra.mxu0 0.0
    %1089 = vmatprep.subr.mxu0 0.0
    %1090 = vmatpush1.msra.mxu0 0.0
    %1091 = vmatprep.subr.mxu0 0.0
    %1092 = vmatpush1.msra.mxu0 0.0
    %1093 = vmatprep.subr.mxu0 0.0
    %1094 = vmatpush1.msra.mxu0 0.0
    %1095 = vmatprep.subr.mxu0 0.0
    %1096 = vmatpush1.msra.mxu0 0.0
    %1097 = vmatprep.subr.mxu0 0.0
    %1098 = vmatpush1.msra.mxu0 0.0
    %1099 = vmatprep.subr.mxu0 0.0
    %1100 = vmatpush1.msra.mxu0 0.0
    %1101 = vmatprep.subr.mxu0 0.0
    %1102 = vmatpush1.msra.mxu0 0.0
    %1103 = vmatprep.subr.mxu0 0.0
    %1104 = vmatpush1.msra.mxu0 0.0
    %1105 = vmatprep.subr.mxu0 0.0
    %1106 = vmatpush1.msra.mxu0 %v1074
    %1107 = vmatprep.subr.mxu0 0.0
    %1108 = vmatpush1.msra.mxu0 %v1073
    %1109 = vmatprep.subr.mxu0 0.0
    %1110 = vmatpush1.msra.mxu0 %v1072
    %1111 = vmatprep.subr.mxu0 0.0
    %1112 = vmatpush1.msra.mxu0 %v1071
    %1113 = vmatprep.subr.mxu0 0.0
    %1114 = vmatpush2.msra.mxu0 0.0
    %1115 = vmatprep.subr.mxu0 0.0
    %1116 = vmatpush2.msra.mxu0 0.0
    %1117 = vmatprep.subr.mxu0 0.0
    %1118 = vmatpush2.msra.mxu0 0.0
    %1119 = vmatprep.subr.mxu0 0.0
    %1120 = vmatpush2.msra.mxu0 0.0
    %1121 = vmatprep.subr.mxu0 0.0
    %1122 = vmatpush2.msra.mxu0 0.0
    %1123 = vmatprep.subr.mxu0 0.0
    %1124 = vmatpush2.msra.mxu0 0.0
    %1125 = vmatprep.subr.mxu0 0.0
    %1126 = vmatpush2.msra.mxu0 0.0
    %1127 = vmatprep.subr.mxu0 0.0
    %1128 = vmatpush2.msra.mxu0 0.0
    %1129 = vmatprep.subr.mxu0 0.0
    %1130 = vmatpush2.msra.mxu0 0.0
    %1131 = vmatprep.subr.mxu0 0.0
    %1132 = vmatpush2.msra.mxu0 0.0
    %1133 = vmatprep.subr.mxu0 0.0
    %1134 = vmatpush2.msra.mxu0 0.0
    %1135 = vmatprep.subr.mxu0 0.0
    %1136 = vmatpush2.msra.mxu0 0.0
    %1137 = vmatprep.subr.mxu0 0.0
    %1138 = vmatpush2.msra.mxu0 0.0
    %1139 = vmatprep.subr.mxu0 0.0
    %1140 = vmatpush2.msra.mxu0 0.0
    %1141 = vmatprep.subr.mxu0 0.0
    %1142 = vmatpush2.msra.mxu0 0.0
    %1143 = vmatprep.subr.mxu0 0.0
    %1144 = vmatpush2.msra.mxu0 0.0
    %1145 = vmatprep.mubr.f32.mxu0 0.0
    %1146 = vmatmul.mubr.f32.gmra.mxu0 %v1076
    %v1147 = vpop.f32.mrf.mxu0
    %v1148 = vadd.f32 0.0, %v1147
    %v1149 = vpop.f32.mrf.mxu0
    %1150 = vmatprep.mubr.f32.mxu0 0.0
    %1151 = vmatmul.mubr.f32.gmra.mxu0 %v1079
    %v1152 = vpop.f32.mrf.mxu0
    %v1153 = vadd.f32 0.0, %v1152
    %v1154 = vpop.f32.mrf.mxu0
    %1155 = vdwg.mxu0
    %v1156 = vadd.f32 %v794, %v1148
    %v1157 = vadd.f32 %v799, %v1153
    %s1158 = scalar_lea.vmem [#allocation2], 96
    %v1159 = vld [vmem:[%s1158] sm:$0xff]
    %v1160 = vld [vmem:[%s1158 + $0x8] sm:$0xff]
    %v1161 = vld [vmem:[%s1158 + $0x10] sm:$0xff]
    %v1162 = vld [vmem:[%s1158 + $0x18] sm:$0xff]
    %v1163 = vlaneseq
    %v1164 = vshrl.u32 %v1163, 7
    %v1165 = vsub.s32 3, %v1164
    %v1166 = vrot.slane %v40, %v1165
    %1167 = vmatprep.subr.mxu0 0.0
    %1168 = vmatpush1.msra.mxu0 0.0
    %1169 = vmatprep.subr.mxu0 0.0
    %1170 = vmatpush1.msra.mxu0 0.0
    %1171 = vmatprep.subr.mxu0 0.0
    %1172 = vmatpush1.msra.mxu0 0.0
    %1173 = vmatprep.subr.mxu0 0.0
    %1174 = vmatpush1.msra.mxu0 0.0
    %1175 = vmatprep.subr.mxu0 0.0
    %1176 = vmatpush1.msra.mxu0 0.0
    %1177 = vmatprep.subr.mxu0 0.0
    %1178 = vmatpush1.msra.mxu0 0.0
    %1179 = vmatprep.subr.mxu0 0.0
    %1180 = vmatpush1.msra.mxu0 0.0
    %1181 = vmatprep.subr.mxu0 0.0
    %1182 = vmatpush1.msra.mxu0 0.0
    %1183 = vmatprep.subr.mxu0 0.0
    %1184 = vmatpush1.msra.mxu0 0.0
    %1185 = vmatprep.subr.mxu0 0.0
    %1186 = vmatpush1.msra.mxu0 0.0
    %1187 = vmatprep.subr.mxu0 0.0
    %1188 = vmatpush1.msra.mxu0 0.0
    %1189 = vmatprep.subr.mxu0 0.0
    %1190 = vmatpush1.msra.mxu0 0.0
    %1191 = vmatprep.subr.mxu0 0.0
    %1192 = vmatpush1.msra.mxu0 %v1162
    %1193 = vmatprep.subr.mxu0 0.0
    %1194 = vmatpush1.msra.mxu0 %v1161
    %1195 = vmatprep.subr.mxu0 0.0
    %1196 = vmatpush1.msra.mxu0 %v1160
    %1197 = vmatprep.subr.mxu0 0.0
    %1198 = vmatpush1.msra.mxu0 %v1159
    %1199 = vmatprep.subr.mxu0 0.0
    %1200 = vmatpush2.msra.mxu0 0.0
    %1201 = vmatprep.subr.mxu0 0.0
    %1202 = vmatpush2.msra.mxu0 0.0
    %1203 = vmatprep.subr.mxu0 0.0
    %1204 = vmatpush2.msra.mxu0 0.0
    %1205 = vmatprep.subr.mxu0 0.0
    %1206 = vmatpush2.msra.mxu0 0.0
    %1207 = vmatprep.subr.mxu0 0.0
    %1208 = vmatpush2.msra.mxu0 0.0
    %1209 = vmatprep.subr.mxu0 0.0
    %1210 = vmatpush2.msra.mxu0 0.0
    %1211 = vmatprep.subr.mxu0 0.0
    %1212 = vmatpush2.msra.mxu0 0.0
    %1213 = vmatprep.subr.mxu0 0.0
    %1214 = vmatpush2.msra.mxu0 0.0
    %1215 = vmatprep.subr.mxu0 0.0
    %1216 = vmatpush2.msra.mxu0 0.0
    %1217 = vmatprep.subr.mxu0 0.0
    %1218 = vmatpush2.msra.mxu0 0.0
    %1219 = vmatprep.subr.mxu0 0.0
    %1220 = vmatpush2.msra.mxu0 0.0
    %1221 = vmatprep.subr.mxu0 0.0
    %1222 = vmatpush2.msra.mxu0 0.0
    %1223 = vmatprep.subr.mxu0 0.0
    %1224 = vmatpush2.msra.mxu0 0.0
    %1225 = vmatprep.subr.mxu0 0.0
    %1226 = vmatpush2.msra.mxu0 0.0
    %1227 = vmatprep.subr.mxu0 0.0
    %1228 = vmatpush2.msra.mxu0 0.0
    %1229 = vmatprep.subr.mxu0 0.0
    %1230 = vmatpush2.msra.mxu0 0.0
    %1231 = vmatprep.mubr.f32.mxu0 0.0
    %1232 = vmatmul.mubr.f32.gmra.mxu0 %v97
    %v1233 = vpop.f32.mrf.mxu0
    %v1234 = vadd.f32 %v1166, %v1233
    %v1235 = vpop.f32.mrf.mxu0
    %1236 = vmatprep.mubr.f32.mxu0 0.0
    %1237 = vmatmul.mubr.f32.gmra.mxu0 %v100
    %v1238 = vpop.f32.mrf.mxu0
    %v1239 = vadd.f32 %v1166, %v1238
    %v1240 = vpop.f32.mrf.mxu0
    %1241 = vdwg.mxu0
    %v1243 = vsel %vm95, %v1234, 0
    %v1246 = vsel %vm95, %v1239, 0
    %1248 = vmatprep.subr.mxu0 0.0
    %1249 = vmatpush1.xpose.msra.mxu0 0.0
    %1250 = vmatprep.subr.mxu0 0.0
    %1251 = vmatpush1.xpose.msra.mxu0 0.0
    %1252 = vmatprep.subr.mxu0 0.0
    %1253 = vmatpush1.xpose.msra.mxu0 0.0
    %1254 = vmatprep.subr.mxu0 0.0
    %1255 = vmatpush1.xpose.msra.mxu0 0.0
    %1256 = vmatprep.subr.mxu0 0.0
    %1257 = vmatpush1.xpose.msra.mxu0 0.0
    %1258 = vmatprep.subr.mxu0 0.0
    %1259 = vmatpush1.xpose.msra.mxu0 0.0
    %1260 = vmatprep.subr.mxu0 0.0
    %1261 = vmatpush1.xpose.msra.mxu0 0.0
    %1262 = vmatprep.subr.mxu0 0.0
    %1263 = vmatpush1.xpose.msra.mxu0 0.0
    %1264 = vmatprep.subr.mxu0 0.0
    %1265 = vmatpush1.xpose.msra.mxu0 0.0
    %1266 = vmatprep.subr.mxu0 0.0
    %1267 = vmatpush1.xpose.msra.mxu0 0.0
    %1268 = vmatprep.subr.mxu0 0.0
    %1269 = vmatpush1.xpose.msra.mxu0 0.0
    %1270 = vmatprep.subr.mxu0 0.0
    %1271 = vmatpush1.xpose.msra.mxu0 0.0
    %1272 = vmatprep.subr.mxu0 0.0
    %1273 = vmatpush1.xpose.msra.mxu0 0.0
    %1274 = vmatprep.subr.mxu0 0.0
    %1275 = vmatpush1.xpose.msra.mxu0 0.0
    %1276 = vmatprep.subr.mxu0 0.0
    %1277 = vmatpush1.xpose.msra.mxu0 %v100
    %1278 = vmatprep.subr.mxu0 0.0
    %1279 = vmatpush1.xpose.msra.mxu0 %v97
    %1280 = vmatprep.subr.mxu0 0.0
    %1281 = vmatpush2.xpose.msra.mxu0 0.0
    %1282 = vmatprep.subr.mxu0 0.0
    %1283 = vmatpush2.xpose.msra.mxu0 0.0
    %1284 = vmatprep.subr.mxu0 0.0
    %1285 = vmatpush2.xpose.msra.mxu0 0.0
    %1286 = vmatprep.subr.mxu0 0.0
    %1287 = vmatpush2.xpose.msra.mxu0 0.0
    %1288 = vmatprep.subr.mxu0 0.0
    %1289 = vmatpush2.xpose.msra.mxu0 0.0
    %1290 = vmatprep.subr.mxu0 0.0
    %1291 = vmatpush2.xpose.msra.mxu0 0.0
    %1292 = vmatprep.subr.mxu0 0.0
    %1293 = vmatpush2.xpose.msra.mxu0 0.0
    %1294 = vmatprep.subr.mxu0 0.0
    %1295 = vmatpush2.xpose.msra.mxu0 0.0
    %1296 = vmatprep.subr.mxu0 0.0
    %1297 = vmatpush2.xpose.msra.mxu0 0.0
    %1298 = vmatprep.subr.mxu0 0.0
    %1299 = vmatpush2.xpose.msra.mxu0 0.0
    %1300 = vmatprep.subr.mxu0 0.0
    %1301 = vmatpush2.xpose.msra.mxu0 0.0
    %1302 = vmatprep.subr.mxu0 0.0
    %1303 = vmatpush2.xpose.msra.mxu0 0.0
    %1304 = vmatprep.subr.mxu0 0.0
    %1305 = vmatpush2.xpose.msra.mxu0 0.0
    %1306 = vmatprep.subr.mxu0 0.0
    %1307 = vmatpush2.xpose.msra.mxu0 0.0
    %1308 = vmatprep.subr.mxu0 0.0
    %1309 = vmatpush2.xpose.msra.mxu0 0.0
    %1310 = vmatprep.subr.mxu0 0.0
    %1311 = vmatpush2.xpose.msra.mxu0 0.0
    %1312 = vmatprep.mubr.f32.mxu0 0.0
    %1313 = vmatmul.mubr.f32.gmra.mxu0 %v1243
    %v1314 = vpop.f32.mrf.mxu0
    %v1315 = vadd.f32 %v85, %v1314
    %v1316 = vpop.f32.mrf.mxu0
    %1317 = vmatprep.mubr.f32.mxu0 0.0
    %1318 = vmatmul.mubr.f32.gmra.mxu0 %v1246
    %v1319 = vpop.f32.mrf.mxu0
    %v1320 = vadd.f32 %v86, %v1319
    %v1321 = vpop.f32.mrf.mxu0
    %1322 = vdwg.mxu0
    %v1323 = vsel %vm258, %v1315, -inf
    %1324 = vmax.xlane.f32.xlu0 %v1323
    %v1325 = vpop.xlane.xlu0 %1324
    %v1326 = vsel %vm258, %v1320, -inf
    %1327 = vmax.xlane.f32.xlu0 %v1326
    %v1328 = vpop.xlane.xlu0 %1327
    %v1329 = vsub.f32 %v1315, %v1325
    %v1330 = vsub.f32 %v1320, %v1328
    %v1331 = vmul.f32 %v1329, 1.442695
    %v1332 = vpow.pop %v1331
    %v1333 = vmul.f32 %v1330, 1.442695
    %v1334 = vpow.pop %v1333
    %v1335 = vsel %vm258, %v1332, 0.0
    %1336 = vadd.xlane.f32.xlu0 %v1335
    %v1337 = vpop.xlane.xlu0 %1336
    %v1338 = vsel %vm258, %v1334, 0.0
    %1339 = vadd.xlane.f32.xlu0 %v1338
    %v1340 = vpop.xlane.xlu0 %1339
    %v1341 = vrcp.pop %v1337
    %v1342 = vrcp.pop %v1340
    %v1343 = vmul.f32 %v1332, %v1341
    %v1344 = vmul.f32 %v1334, %v1342
    %v1346 = vsel %vm258, %v1343, 0
    %v1349 = vsel %vm258, %v1344, 0
    %1351 = vmatprep.subr.mxu0 0.0
    %1352 = vmatpush1.msra.mxu0 0.0
    %1353 = vmatprep.subr.mxu0 0.0
    %1354 = vmatpush1.msra.mxu0 0.0
    %1355 = vmatprep.subr.mxu0 0.0
    %1356 = vmatpush1.msra.mxu0 0.0
    %1357 = vmatprep.subr.mxu0 0.0
    %1358 = vmatpush1.msra.mxu0 0.0
    %1359 = vmatprep.subr.mxu0 0.0
    %1360 = vmatpush1.msra.mxu0 0.0
    %1361 = vmatprep.subr.mxu0 0.0
    %1362 = vmatpush1.msra.mxu0 0.0
    %1363 = vmatprep.subr.mxu0 0.0
    %1364 = vmatpush1.msra.mxu0 0.0
    %1365 = vmatprep.subr.mxu0 0.0
    %1366 = vmatpush1.msra.mxu0 0.0
    %1367 = vmatprep.subr.mxu0 0.0
    %1368 = vmatpush1.msra.mxu0 0.0
    %1369 = vmatprep.subr.mxu0 0.0
    %1370 = vmatpush1.msra.mxu0 0.0
    %1371 = vmatprep.subr.mxu0 0.0
    %1372 = vmatpush1.msra.mxu0 0.0
    %1373 = vmatprep.subr.mxu0 0.0
    %1374 = vmatpush1.msra.mxu0 0.0
    %1375 = vmatprep.subr.mxu0 0.0
    %1376 = vmatpush1.msra.mxu0 0.0
    %1377 = vmatprep.subr.mxu0 0.0
    %1378 = vmatpush1.msra.mxu0 0.0
    %1379 = vmatprep.subr.mxu0 0.0
    %1380 = vmatpush1.msra.mxu0 %v39
    %1381 = vmatprep.subr.mxu0 0.0
    %1382 = vmatpush1.msra.mxu0 %v38
    %1383 = vmatprep.subr.mxu0 0.0
    %1384 = vmatpush2.msra.mxu0 0.0
    %1385 = vmatprep.subr.mxu0 0.0
    %1386 = vmatpush2.msra.mxu0 0.0
    %1387 = vmatprep.subr.mxu0 0.0
    %1388 = vmatpush2.msra.mxu0 0.0
    %1389 = vmatprep.subr.mxu0 0.0
    %1390 = vmatpush2.msra.mxu0 0.0
    %1391 = vmatprep.subr.mxu0 0.0
    %1392 = vmatpush2.msra.mxu0 0.0
    %1393 = vmatprep.subr.mxu0 0.0
    %1394 = vmatpush2.msra.mxu0 0.0
    %1395 = vmatprep.subr.mxu0 0.0
    %1396 = vmatpush2.msra.mxu0 0.0
    %1397 = vmatprep.subr.mxu0 0.0
    %1398 = vmatpush2.msra.mxu0 0.0
    %1399 = vmatprep.subr.mxu0 0.0
    %1400 = vmatpush2.msra.mxu0 0.0
    %1401 = vmatprep.subr.mxu0 0.0
    %1402 = vmatpush2.msra.mxu0 0.0
    %1403 = vmatprep.subr.mxu0 0.0
    %1404 = vmatpush2.msra.mxu0 0.0
    %1405 = vmatprep.subr.mxu0 0.0
    %1406 = vmatpush2.msra.mxu0 0.0
    %1407 = vmatprep.subr.mxu0 0.0
    %1408 = vmatpush2.msra.mxu0 0.0
    %1409 = vmatprep.subr.mxu0 0.0
    %1410 = vmatpush2.msra.mxu0 0.0
    %1411 = vmatprep.subr.mxu0 0.0
    %1412 = vmatpush2.msra.mxu0 0.0
    %1413 = vmatprep.subr.mxu0 0.0
    %1414 = vmatpush2.msra.mxu0 0.0
    %1415 = vmatprep.mubr.f32.mxu0 0.0
    %1416 = vmatmul.mubr.f32.gmra.mxu0 %v1346
    %v1417 = vpop.f32.mrf.mxu0
    %v1418 = vadd.f32 0.0, %v1417
    %v1419 = vpop.f32.mrf.mxu0
    %1420 = vmatprep.mubr.f32.mxu0 0.0
    %1421 = vmatmul.mubr.f32.gmra.mxu0 %v1349
    %v1422 = vpop.f32.mrf.mxu0
    %v1423 = vadd.f32 0.0, %v1422
    %v1424 = vpop.f32.mrf.mxu0
    %1425 = vdwg.mxu0
    %s1426 = scalar_lea.vmem [#allocation2], 224
    %v1427 = vld [vmem:[%s1426] sm:$0xff]
    %v1428 = vld [vmem:[%s1426 + $0x8] sm:$0xff]
    %v1429 = vld [vmem:[%s1426 + $0x10] sm:$0xff]
    %v1430 = vld [vmem:[%s1426 + $0x18] sm:$0xff]
    %v1432 = vsel %vm95, %v1418, 0
    %v1435 = vsel %vm95, %v1423, 0
    %1437 = vmatprep.subr.mxu0 0.0
    %1438 = vmatpush1.msra.mxu0 0.0
    %1439 = vmatprep.subr.mxu0 0.0
    %1440 = vmatpush1.msra.mxu0 0.0
    %1441 = vmatprep.subr.mxu0 0.0
    %1442 = vmatpush1.msra.mxu0 0.0
    %1443 = vmatprep.subr.mxu0 0.0
    %1444 = vmatpush1.msra.mxu0 0.0
    %1445 = vmatprep.subr.mxu0 0.0
    %1446 = vmatpush1.msra.mxu0 0.0
    %1447 = vmatprep.subr.mxu0 0.0
    %1448 = vmatpush1.msra.mxu0 0.0
    %1449 = vmatprep.subr.mxu0 0.0
    %1450 = vmatpush1.msra.mxu0 0.0
    %1451 = vmatprep.subr.mxu0 0.0
    %1452 = vmatpush1.msra.mxu0 0.0
    %1453 = vmatprep.subr.mxu0 0.0
    %1454 = vmatpush1.msra.mxu0 0.0
    %1455 = vmatprep.subr.mxu0 0.0
    %1456 = vmatpush1.msra.mxu0 0.0
    %1457 = vmatprep.subr.mxu0 0.0
    %1458 = vmatpush1.msra.mxu0 0.0
    %1459 = vmatprep.subr.mxu0 0.0
    %1460 = vmatpush1.msra.mxu0 0.0
    %1461 = vmatprep.subr.mxu0 0.0
    %1462 = vmatpush1.msra.mxu0 %v1430
    %1463 = vmatprep.subr.mxu0 0.0
    %1464 = vmatpush1.msra.mxu0 %v1429
    %1465 = vmatprep.subr.mxu0 0.0
    %1466 = vmatpush1.msra.mxu0 %v1428
    %1467 = vmatprep.subr.mxu0 0.0
    %1468 = vmatpush1.msra.mxu0 %v1427
    %1469 = vmatprep.subr.mxu0 0.0
    %1470 = vmatpush2.msra.mxu0 0.0
    %1471 = vmatprep.subr.mxu0 0.0
    %1472 = vmatpush2.msra.mxu0 0.0
    %1473 = vmatprep.subr.mxu0 0.0
    %1474 = vmatpush2.msra.mxu0 0.0
    %1475 = vmatprep.subr.mxu0 0.0
    %1476 = vmatpush2.msra.mxu0 0.0
    %1477 = vmatprep.subr.mxu0 0.0
    %1478 = vmatpush2.msra.mxu0 0.0
    %1479 = vmatprep.subr.mxu0 0.0
    %1480 = vmatpush2.msra.mxu0 0.0
    %1481 = vmatprep.subr.mxu0 0.0
    %1482 = vmatpush2.msra.mxu0 0.0
    %1483 = vmatprep.subr.mxu0 0.0
    %1484 = vmatpush2.msra.mxu0 0.0
    %1485 = vmatprep.subr.mxu0 0.0
    %1486 = vmatpush2.msra.mxu0 0.0
    %1487 = vmatprep.subr.mxu0 0.0
    %1488 = vmatpush2.msra.mxu0 0.0
    %1489 = vmatprep.subr.mxu0 0.0
    %1490 = vmatpush2.msra.mxu0 0.0
    %1491 = vmatprep.subr.mxu0 0.0
    %1492 = vmatpush2.msra.mxu0 0.0
    %1493 = vmatprep.subr.mxu0 0.0
    %1494 = vmatpush2.msra.mxu0 0.0
    %1495 = vmatprep.subr.mxu0 0.0
    %1496 = vmatpush2.msra.mxu0 0.0
    %1497 = vmatprep.subr.mxu0 0.0
    %1498 = vmatpush2.msra.mxu0 0.0
    %1499 = vmatprep.subr.mxu0 0.0
    %1500 = vmatpush2.msra.mxu0 0.0
    %1501 = vmatprep.mubr.f32.mxu0 0.0
    %1502 = vmatmul.mubr.f32.gmra.mxu0 %v1432
    %v1503 = vpop.f32.mrf.mxu0
    %v1504 = vadd.f32 0.0, %v1503
    %v1505 = vpop.f32.mrf.mxu0
    %1506 = vmatprep.mubr.f32.mxu0 0.0
    %1507 = vmatmul.mubr.f32.gmra.mxu0 %v1435
    %v1508 = vpop.f32.mrf.mxu0
    %v1509 = vadd.f32 0.0, %v1508
    %v1510 = vpop.f32.mrf.mxu0
    %1511 = vdwg.mxu0
    %v1512 = vadd.f32 %v1156, %v1504
    %v1513 = vadd.f32 %v1157, %v1509
    %v1514 = vlaneseq
    %v1515 = vshrl.u32 %v1514, 7
    %v1516 = vsub.s32 4, %v1515
    %v1517 = vrot.slane %v40, %v1516
    %v1518 = vadd.f32 %v1512, %v1517
    %v1519 = vadd.f32 %v1513, %v1517
    %v1520 = vadd.f32 %v38, %v1518
    %v1521 = vadd.f32 %v39, %v1519
    %v1522 = vsel %vm95, %v1520, 0.0
    %1523 = vadd.xlane.f32.xlu0 %v1522
    %v1524 = vpop.xlane.xlu0 %1523
    %v1525 = vsel %vm95, %v1521, 0.0
    %1526 = vadd.xlane.f32.xlu0 %v1525
    %v1527 = vpop.xlane.xlu0 %1526
    %v1528 = vrcp.pop 32.0
    %v1529 = vmul.f32 %v1524, %v1528
    %v1530 = vmul.f32 %v1527, %v1528
    %v1531 = vsub.f32 %v1520, %v1529
    %v1532 = vsub.f32 %v1521, %v1530
    %v1533 = vmul.f32 %v1531, %v1531
    %v1534 = vmul.f32 %v1532, %v1532
    %v1535 = vsel %vm95, %v1533, 0.0
    %1536 = vadd.xlane.f32.xlu0 %v1535
    %v1537 = vpop.xlane.xlu0 %1536
    %v1538 = vsel %vm95, %v1534, 0.0
    %1539 = vadd.xlane.f32.xlu0 %v1538
    %v1540 = vpop.xlane.xlu0 %1539
    %v1541 = vmul.f32 %v1537, %v1528
    %v1542 = vmul.f32 %v1540, %v1528
    %v1543 = vadd.f32 %v1541, 1e-05
    %v1544 = vadd.f32 %v1542, 1e-05
    %v1545 = vrsqrt.pop %v1543
    %v1546 = vrsqrt.pop %v1544
    %v1547 = vmul.f32 %v1531, %v1545
    %v1548 = vmul.f32 %v1532, %v1546
    %v1549 = vlaneseq
    %v1550 = vshrl.u32 %v1549, 7
    %v1551 = vsub.s32 6, %v1550
    %v1552 = vrot.slane %v40, %v1551
    %v1553 = vmul.f32 %v1547, %v1552
    %v1554 = vmul.f32 %v1548, %v1552
    %v1555 = vlaneseq
    %v1556 = vshrl.u32 %v1555, 7
    %v1557 = vsub.s32 7, %v1556
    %v1558 = vrot.slane %v40, %v1557
    %v1559 = vadd.f32 %v1553, %v1558
    %v1560 = vadd.f32 %v1554, %v1558
    %v1561 = vld [vmem:[%s2] sm:$0xff]
    %v1562 = vld [vmem:[%s2 + $0x8] sm:$0xff]
    %v1563 = vld [vmem:[%s2 + $0x10] sm:$0xff]
    %v1564 = vld [vmem:[%s2 + $0x18] sm:$0xff]
    %v1565 = vld [vmem:[%s5] sm:$0x1]
    %v1567 = vlaneseq
    %v1568 = vshrl.u32 %v1567, 7
    %v1569 = vsub.s32 0, %v1568
    %v1570 = vrot.slane %v1565, %v1569
    %v1573 = vsel %vm95, %v1559, 0
    %v1576 = vsel %vm95, %v1560, 0
    %1578 = vmatprep.subr.mxu0 0.0
    %1579 = vmatpush1.msra.mxu0 0.0
    %1580 = vmatprep.subr.mxu0 0.0
    %1581 = vmatpush1.msra.mxu0 0.0
    %1582 = vmatprep.subr.mxu0 0.0
    %1583 = vmatpush1.msra.mxu0 0.0
    %1584 = vmatprep.subr.mxu0 0.0
    %1585 = vmatpush1.msra.mxu0 0.0
    %1586 = vmatprep.subr.mxu0 0.0
    %1587 = vmatpush1.msra.mxu0 0.0
    %1588 = vmatprep.subr.mxu0 0.0
    %1589 = vmatpush1.msra.mxu0 0.0
    %1590 = vmatprep.subr.mxu0 0.0
    %1591 = vmatpush1.msra.mxu0 0.0
    %1592 = vmatprep.subr.mxu0 0.0
    %1593 = vmatpush1.msra.mxu0 0.0
    %1594 = vmatprep.subr.mxu0 0.0
    %1595 = vmatpush1.msra.mxu0 0.0
    %1596 = vmatprep.subr.mxu0 0.0
    %1597 = vmatpush1.msra.mxu0 0.0
    %1598 = vmatprep.subr.mxu0 0.0
    %1599 = vmatpush1.msra.mxu0 0.0
    %1600 = vmatprep.subr.mxu0 0.0
    %1601 = vmatpush1.msra.mxu0 0.0
    %1602 = vmatprep.subr.mxu0 0.0
    %1603 = vmatpush1.msra.mxu0 %v1564
    %1604 = vmatprep.subr.mxu0 0.0
    %1605 = vmatpush1.msra.mxu0 %v1563
    %1606 = vmatprep.subr.mxu0 0.0
    %1607 = vmatpush1.msra.mxu0 %v1562
    %1608 = vmatprep.subr.mxu0 0.0
    %1609 = vmatpush1.msra.mxu0 %v1561
    %1610 = vmatprep.subr.mxu0 0.0
    %1611 = vmatpush2.msra.mxu0 0.0
    %1612 = vmatprep.subr.mxu0 0.0
    %1613 = vmatpush2.msra.mxu0 0.0
    %1614 = vmatprep.subr.mxu0 0.0
    %1615 = vmatpush2.msra.mxu0 0.0
    %1616 = vmatprep.subr.mxu0 0.0
    %1617 = vmatpush2.msra.mxu0 0.0
    %1618 = vmatprep.subr.mxu0 0.0
    %1619 = vmatpush2.msra.mxu0 0.0
    %1620 = vmatprep.subr.mxu0 0.0
    %1621 = vmatpush2.msra.mxu0 0.0
    %1622 = vmatprep.subr.mxu0 0.0
    %1623 = vmatpush2.msra.mxu0 0.0
    %1624 = vmatprep.subr.mxu0 0.0
    %1625 = vmatpush2.msra.mxu0 0.0
    %1626 = vmatprep.subr.mxu0 0.0
    %1627 = vmatpush2.msra.mxu0 0.0
    %1628 = vmatprep.subr.mxu0 0.0
    %1629 = vmatpush2.msra.mxu0 0.0
    %1630 = vmatprep.subr.mxu0 0.0
    %1631 = vmatpush2.msra.mxu0 0.0
    %1632 = vmatprep.subr.mxu0 0.0
    %1633 = vmatpush2.msra.mxu0 0.0
    %1634 = vmatprep.subr.mxu0 0.0
    %1635 = vmatpush2.msra.mxu0 0.0
    %1636 = vmatprep.subr.mxu0 0.0
    %1637 = vmatpush2.msra.mxu0 0.0
    %1638 = vmatprep.subr.mxu0 0.0
    %1639 = vmatpush2.msra.mxu0 0.0
    %1640 = vmatprep.subr.mxu0 0.0
    %1641 = vmatpush2.msra.mxu0 0.0
    %1642 = vmatprep.mubr.f32.mxu0 0.0
    %1643 = vmatmul.mubr.f32.gmra.mxu0 %v1573
    %v1644 = vpop.f32.mrf.mxu0
    %v1645 = vadd.f32 %v1570, %v1644
    %v1646 = vpop.f32.mrf.mxu0
    %1647 = vmatprep.mubr.f32.mxu0 0.0
    %1648 = vmatmul.mubr.f32.gmra.mxu0 %v1576
    %v1649 = vpop.f32.mrf.mxu0
    %v1650 = vadd.f32 %v1570, %v1649
    %v1651 = vpop.f32.mrf.mxu0
    %1652 = vdwg.mxu0
    %v1653 = vmax.f32 %v1645, 0.0
    %v1654 = vmax.f32 %v1650, 0.0
    %v1655 = vld [vmem:[%s3] sm:$0xff]
    %v1656 = vld [vmem:[%s3 + $0x8] sm:$0xff]
    %v1657 = vld [vmem:[%s3 + $0x10] sm:$0xff]
    %v1658 = vld [vmem:[%s3 + $0x18] sm:$0xff]
    %v1659 = vld [vmem:[%s3 + $0x20] sm:$0xff]
    %v1660 = vld [vmem:[%s3 + $0x28] sm:$0xff]
    %v1661 = vld [vmem:[%s3 + $0x30] sm:$0xff]
    %v1662 = vld [vmem:[%s3 + $0x38] sm:$0xff]
    %v1663 = vlaneseq
    %v1664 = vshrl.u32 %v1663, 7
    %v1665 = vsub.s32 5, %v1664
    %v1666 = vrot.slane %v40, %v1665
    %vm1667 = vcmask 523264
    %v1669 = vsel %vm1667, %v1653, 0
    %v1672 = vsel %vm1667, %v1654, 0
    %1674 = vmatprep.subr.mxu0 0.0
    %1675 = vmatpush1.msra.mxu0 0.0
    %1676 = vmatprep.subr.mxu0 0.0
    %1677 = vmatpush1.msra.mxu0 0.0
    %1678 = vmatprep.subr.mxu0 0.0
    %1679 = vmatpush1.msra.mxu0 0.0
    %1680 = vmatprep.subr.mxu0 0.0
    %1681 = vmatpush1.msra.mxu0 0.0
    %1682 = vmatprep.subr.mxu0 0.0
    %1683 = vmatpush1.msra.mxu0 0.0
    %1684 = vmatprep.subr.mxu0 0.0
    %1685 = vmatpush1.msra.mxu0 0.0
    %1686 = vmatprep.subr.mxu0 0.0
    %1687 = vmatpush1.msra.mxu0 0.0
    %1688 = vmatprep.subr.mxu0 0.0
    %1689 = vmatpush1.msra.mxu0 0.0
    %1690 = vmatprep.subr.mxu0 0.0
    %1691 = vmatpush1.msra.mxu0 %v1662
    %1692 = vmatprep.subr.mxu0 0.0
    %1693 = vmatpush1.msra.mxu0 %v1661
    %1694 = vmatprep.subr.mxu0 0.0
    %1695 = vmatpush1.msra.mxu0 %v1660
    %1696 = vmatprep.subr.mxu0 0.0
    %1697 = vmatpush1.msra.mxu0 %v1659
    %1698 = vmatprep.subr.mxu0 0.0
    %1699 = vmatpush1.msra.mxu0 %v1658
    %1700 = vmatprep.subr.mxu0 0.0
    %1701 = vmatpush1.msra.mxu0 %v1657
    %1702 = vmatprep.subr.mxu0 0.0
    %1703 = vmatpush1.msra.mxu0 %v1656
    %1704 = vmatprep.subr.mxu0 0.0
    %1705 = vmatpush1.msra.mxu0 %v1655
    %1706 = vmatprep.subr.mxu0 0.0
    %1707 = vmatpush2.msra.mxu0 0.0
    %1708 = vmatprep.subr.mxu0 0.0
    %1709 = vmatpush2.msra.mxu0 0.0
    %1710 = vmatprep.subr.mxu0 0.0
    %1711 = vmatpush2.msra.mxu0 0.0
    %1712 = vmatprep.subr.mxu0 0.0
    %1713 = vmatpush2.msra.mxu0 0.0
    %1714 = vmatprep.subr.mxu0 0.0
    %1715 = vmatpush2.msra.mxu0 0.0
    %1716 = vmatprep.subr.mxu0 0.0
    %1717 = vmatpush2.msra.mxu0 0.0
    %1718 = vmatprep.subr.mxu0 0.0
    %1719 = vmatpush2.msra.mxu0 0.0
    %1720 = vmatprep.subr.mxu0 0.0
    %1721 = vmatpush2.msra.mxu0 0.0
    %1722 = vmatprep.subr.mxu0 0.0
    %1723 = vmatpush2.msra.mxu0 0.0
    %1724 = vmatprep.subr.mxu0 0.0
    %1725 = vmatpush2.msra.mxu0 0.0
    %1726 = vmatprep.subr.mxu0 0.0
    %1727 = vmatpush2.msra.mxu0 0.0
    %1728 = vmatprep.subr.mxu0 0.0
    %1729 = vmatpush2.msra.mxu0 0.0
    %1730 = vmatprep.subr.mxu0 0.0
    %1731 = vmatpush2.msra.mxu0 0.0
    %1732 = vmatprep.subr.mxu0 0.0
    %1733 = vmatpush2.msra.mxu0 0.0
    %1734 = vmatprep.subr.mxu0 0.0
    %1735 = vmatpush2.msra.mxu0 0.0
    %1736 = vmatprep.subr.mxu0 0.0
    %1737 = vmatpush2.msra.mxu0 0.0
    %1738 = vmatprep.mubr.f32.mxu0 0.0
    %1739 = vmatmul.mubr.f32.gmra.mxu0 %v1669
    %v1740 = vpop.f32.mrf.mxu0
    %v1741 = vadd.f32 %v1666, %v1740
    %v1742 = vpop.f32.mrf.mxu0
    %1743 = vmatprep.mubr.f32.mxu0 0.0
    %1744 = vmatmul.mubr.f32.gmra.mxu0 %v1672
    %v1745 = vpop.f32.mrf.mxu0
    %v1746 = vadd.f32 %v1666, %v1745
    %v1747 = vpop.f32.mrf.mxu0
    %1748 = vdwg.mxu0
    %v1749 = vadd.f32 %v1559, %v1741
    %v1750 = vadd.f32 %v1560, %v1746
    %v1751 = vsel %vm95, %v1749, 0.0
    %1752 = vadd.xlane.f32.xlu0 %v1751
    %v1753 = vpop.xlane.xlu0 %1752
    %v1754 = vsel %vm95, %v1750, 0.0
    %1755 = vadd.xlane.f32.xlu0 %v1754
    %v1756 = vpop.xlane.xlu0 %1755
    %v1757 = vmul.f32 %v1753, %v1528
    %v1758 = vmul.f32 %v1756, %v1528
    %v1759 = vsub.f32 %v1749, %v1757
    %v1760 = vsub.f32 %v1750, %v1758
    %v1761 = vmul.f32 %v1759, %v1759
    %v1762 = vmul.f32 %v1760, %v1760
    %v1763 = vsel %vm95, %v1761, 0.0
    %1764 = vadd.xlane.f32.xlu0 %v1763
    %v1765 = vpop.xlane.xlu0 %1764
    %v1766 = vsel %vm95, %v1762, 0.0
    %1767 = vadd.xlane.f32.xlu0 %v1766
    %v1768 = vpop.xlane.xlu0 %1767
    %v1769 = vmul.f32 %v1765, %v1528
    %v1770 = vmul.f32 %v1768, %v1528
    %v1771 = vadd.f32 %v1769, 1e-05
    %v1772 = vadd.f32 %v1770, 1e-05
    %v1773 = vrsqrt.pop %v1771
    %v1774 = vrsqrt.pop %v1772
    %v1775 = vmul.f32 %v1759, %v1773
    %v1776 = vmul.f32 %v1760, %v1774
    %v1777 = vlaneseq
    %v1778 = vshrl.u32 %v1777, 7
    %v1779 = vsub.s32 0, %v1778
    %v1780 = vrot.slane %v41, %v1779
    %v1781 = vmul.f32 %v1775, %v1780
    %v1782 = vmul.f32 %v1776, %v1780
    %v1783 = vlaneseq
    %v1784 = vshrl.u32 %v1783, 7
    %v1785 = vsub.s32 1, %v1784
    %v1786 = vrot.slane %v41, %v1785
    %v1787 = vadd.f32 %v1781, %v1786
    %v1788 = vadd.f32 %v1782, %v1786
    %v1790 = vrot.slane %v1787, 1
    %1791 = vrot.lane.b32.xlu0 %v1790, 32
    %v1792 = vpop.permute.xlu0 %1791
    %v1794 = vrot.slane %v1787, 2
    %1795 = vrot.lane.b32.xlu0 %v1794, 64
    %v1796 = vpop.permute.xlu0 %1795
    %v1798 = vrot.slane %v1787, 3
    %1799 = vrot.lane.b32.xlu0 %v1798, 96
    %v1800 = vpop.permute.xlu0 %1799
    %v1802 = vsel %vm95, %v1787, %v1792
    %v1803 = vsel %vm1667, %v1802, %v1796
    %vm1804 = vcmask 785408
    %v1805 = vsel %vm1804, %v1803, %v1800
    %1806 = vst [vmem:[#allocation5] sm:$0x1] %v1805
    %1807 = vst [vmem:[#allocation5 - $0x3] sm:$0x10] %v1805
    %v1809 = vrot.slane %v1788, 1
    %1810 = vrot.lane.b32.xlu0 %v1809, 32
    %v1811 = vpop.permute.xlu0 %1810
    %v1813 = vrot.slane %v1788, 2
    %1814 = vrot.lane.b32.xlu0 %v1813, 64
    %v1815 = vpop.permute.xlu0 %1814
    %v1817 = vrot.slane %v1788, 3
    %1818 = vrot.lane.b32.xlu0 %v1817, 96
    %v1819 = vpop.permute.xlu0 %1818
    %v1821 = vsel %vm95, %v1788, %v1811
    %v1822 = vsel %vm1667, %v1821, %v1815
    %v1823 = vsel %vm1804, %v1822, %v1819
    %1824 = vst [vmem:[#allocation5 + $0x2] sm:$0x1] %v1823
    %1825 = vst [vmem:[#allocation5 - $0x1] sm:$0x10] %v1823
    // Predicated region
    $region30: #{tpu_custom_call.1} parent=1 // pred_check
      _
    $region31: #{tpu_custom_call.1} parent=1 // pred_check_branch
      %1827 = sbr.rel (0) target = $region33
    $region32: #{tpu_custom_call.1} parent=1 // pred_region
      %s1829 = ssub.s32 64, 64
      %1830 = vsyncadd [#allocation4], %s1829
      %s1832 = sshll.u32 [#allocation5], 4
      %s1833 = int_to_ptr.vmem [resolvable:$true] %s1832
      %1835 = dma.vmem_to_hbm [thread:$0]  %s1833, 64, %s6, [#allocation4]
    $region33: #{tpu_custom_call.1} parent=1 // pred_fallthru
      _
    // Predicated region
    $region34: #{tpu_custom_call.1} parent=1 // pred_check
      _
    $region35: #{tpu_custom_call.1} parent=1 // pred_check_branch
      %1837 = sbr.rel (0) target = $region37
    $region36: #{tpu_custom_call.1} parent=1 // pred_region
      %1838 = dma.done [#allocation4], 64
    $region37: #{tpu_custom_call.1} parent=1 // pred_fallthru
      _
    %1839 = vsyncpa [#allocation3], 1
    %1840 = vsyncpa [#allocation4], 1

</llo_original>
